<compile_context>
chip_gen: v6e
topology: v6e:2x2x1
jax: 0.10.0
libtpu: 0.0.40
codegen_flags: <defaults>
</compile_context>

<pallas_src>
import math
from functools import partial

import jax
import jax.numpy as jnp
from jax import lax
from jax.experimental import pallas as pl
from jax.experimental.pallas import tpu as pltpu


def _round_up(x, m):
    return ((x + m - 1) // m) * m


def _deconv_phase_kernel(x_ref, w_ref, b_ref, o_ref, *,
                         taps, tile_rows, wop, cin_g, m_out):
    # x_ref: (1, Hp, Wp, Cin_g)      full padded input plane for this (group, image)
    # w_ref: (1, DD, Cin_g, M)       per-tap weights, M = s*s*Cout_g_pad (mult of 128)
    # b_ref: (1, 1, M)               bias, phase-replicated / zero-padded
    # o_ref: (1, TR, Wop, M)         output tile (phase-packed, pixel-shuffled later)
    r = pl.program_id(1)
    row0 = pl.multiple_of(r * tile_rows, tile_rows)

    # init accumulator with the bias (no separate scratch, no epilogue add)
    acc = jnp.broadcast_to(b_ref[0].astype(jnp.float32),
                           (tile_rows * wop, m_out))

    # unrolled tap loop: DD ~= ceil(K/s)^2 MXU dots, accumulated in registers
    for t, (oh, ow) in enumerate(taps):
        patch = x_ref[0, pl.ds(row0 + oh, tile_rows), pl.ds(ow, wop), :]
        acc = acc + jnp.dot(patch.reshape(tile_rows * wop, cin_g),
                            w_ref[0, t],
                            preferred_element_type=jnp.float32)

    o_ref[0] = acc.reshape(tile_rows, wop, m_out).astype(o_ref.dtype)


def conv_transpose2d_pallas(x, weight, bias, *, stride, padding,
                            output_padding, groups,
                            compute_dtype=jnp.bfloat16):
    """ConvTranspose2d forward.

    x:      (N, Cin, H, W)  NCHW (PyTorch convention)
    weight: (Cin, Cout // groups, K, K)  (PyTorch ConvTranspose2d convention)
    bias:   (Cout,)
    Returns (N, Cout, Ho, Wo) NCHW, dtype of x.
    compute_dtype: dtype fed to the MXU (default bf16; accumulation is f32).
    """
    N, Cin, H, W = x.shape
    K = weight.shape[2]
    G = groups
    Cin_g = Cin // G
    Cout_g = weight.shape[1]
    Cout = Cout_g * G
    s, p, op = stride, padding, output_padding
    Ho = (H - 1) * s - 2 * p + K + op
    Wo = (W - 1) * s - 2 * p + K + op
    pad_lo = K - 1 - p          # may be negative; handled by the tap table below

    out_dtype = x.dtype
    if compute_dtype is None:
        compute_dtype = x.dtype

    # ---------------- phase / tap bookkeeping (Python ints) --------------------
    # Output pixel (oh, ow) = (s*i + ph, s*j + pw).  For phase ph, kernel tap kh
    # contributes iff (ph + kh - pad_lo) % s == 0, and then reads input row
    # i + dh with dh = (ph + kh - pad_lo) / s.  Taps a phase does not use get
    # zero weights, so one uniform (Dh x Dw)-tap stride-1 conv covers all phases.
    d_set = set()
    for ph in range(s):
        for kh in range(K):
            t = ph + kh - pad_lo
            if t % s == 0:
                d_set.add(t // s)
    d_list = sorted(d_set)
    Dh = len(d_list)
    d_min, d_max = d_list[0], d_list[-1]
    DD = Dh * Dh

    Hop = -(-Ho // s)                 # compute-grid rows (pre pixel-shuffle)
    Wop = -(-Wo // s)
    Wop_pad = _round_up(Wop, 8)       # keep in-kernel reshapes sublane-aligned

    # lane-dense output: make s*s*Cout_g_pad a multiple of 128
    m_unit = 128 // math.gcd(128, s * s)
    Cout_g_pad = _round_up(max(Cout_g, 1), m_unit)
    M = s * s * Cout_g_pad

    # ---------------- row tiling (bound the f32 accumulator tile) --------------
    max_rows = max(1, (2 * 1024 * 1024) // (4 * M * Wop_pad))
    TR = max(1, min(Hop, max_rows))
    RT = -(-Hop // TR)
    R_pad = RT * TR

    # ---------------- pad + regroup the input (plain-JAX layout glue) ----------
    pad_top = max(0, -d_min)
    pad_bot = max(0, R_pad - 1 + d_max - (H - 1))
    pad_l = max(0, -d_min)
    pad_r = max(0, Wop_pad - 1 + d_max - (W - 1))
    off_h = [d + pad_top for d in d_list]
    off_w = [d + pad_l for d in d_list]
    Hp = H + pad_top + pad_bot
    Wp = W + pad_l + pad_r

    x_nhwc = jnp.transpose(x, (0, 2, 3, 1))                       # (N, H, W, Cin)
    x_g = x_nhwc.reshape(N, H, W, G, Cin_g)
    x_g = jnp.transpose(x_g, (3, 0, 1, 2, 4)).reshape(G * N, H, W, Cin_g)
    x_pp = jnp.pad(x_g, ((0, 0), (pad_top, pad_bot), (pad_l, pad_r), (0, 0)))
    x_pp = x_pp.astype(compute_dtype)

    # ---------------- per-group, per-tap weight table ---------------------------
    # w2[g, a, b, ci, ph, pw, co] = weight[g*Cin_g+ci, co, K-1-kh, K-1-kw]
    #   with kh = s*d_list[a] + pad_lo - ph (zero if kh/kw fall outside [0, K)).
    w2 = jnp.zeros((G, Dh, Dh, Cin_g, s, s, Cout_g_pad), dtype=weight.dtype)
    for a, dh in enumerate(d_list):
        for ph in range(s):
            kh = s * dh + pad_lo - ph
            if not (0 <= kh < K):
                continue
            for b, dw in enumerate(d_list):
                for pw in range(s):
                    kw = s * dw + pad_lo - pw
                    if not (0 <= kw < K):
                        continue
                    blk = weight[:, :, K - 1 - kh, K - 1 - kw]     # (Cin, Cout_g)
                    blk = blk.reshape(G, Cin_g, Cout_g)
                    w2 = w2.at[:, a, b, :, ph, pw, :Cout_g].set(blk)
    w2 = w2.reshape(G, DD, Cin_g, M).astype(compute_dtype)

    bias2 = jnp.zeros((G, s, s, Cout_g_pad), jnp.float32)
    bias2 = bias2.at[:, :, :, :Cout_g].set(
        jnp.broadcast_to(bias.reshape(G, 1, 1, Cout_g).astype(jnp.float32),
                         (G, s, s, Cout_g)))
    bias2 = bias2.reshape(G, 1, M)

    taps = [(off_h[a], off_w[b]) for a in range(Dh) for b in range(Dh)]

    kernel = partial(_deconv_phase_kernel, taps=taps, tile_rows=TR,
                     wop=Wop_pad, cin_g=Cin_g, m_out=M)

    # VMEM budget (explicit for the v7x 64 MiB / v5e 16 MiB-scoped-default cases)
    comp_sz = jnp.dtype(compute_dtype).itemsize
    out_sz = jnp.dtype(out_dtype).itemsize
    est_vmem = (2 * Hp * Wp * Cin_g * comp_sz          # input plane (dbl buffered)
                + 2 * DD * Cin_g * M * comp_sz         # weights
                + 2 * TR * Wop_pad * M * out_sz        # output tile
                + 3 * TR * Wop_pad * M * 4             # f32 accumulator temps
                + 4 * M * 4)
    vmem_limit = int(min(100 * 2 ** 20, max(32 * 2 ** 20, 2 * est_vmem)))

    if G == 1:
        w_index = lambda b, r: (0, 0, 0, 0)
        b_index = lambda b, r: (0, 0, 0)
    else:
        w_index = lambda b, r: (b // N, 0, 0, 0)
        b_index = lambda b, r: (b // N, 0, 0)

    y = pl.pallas_call(
        kernel,
        out_shape=jax.ShapeDtypeStruct((G * N, R_pad, Wop_pad, M), out_dtype),
        grid_spec=pltpu.PrefetchScalarGridSpec(
            num_scalar_prefetch=0,
            grid=(G * N, RT),
            in_specs=[
                pl.BlockSpec((1, Hp, Wp, Cin_g), lambda b, r: (b, 0, 0, 0)),
                pl.BlockSpec((1, DD, Cin_g, M), w_index),
                pl.BlockSpec((1, 1, M), b_index),
            ],
            out_specs=pl.BlockSpec((1, TR, Wop_pad, M),
                                   lambda b, r: (b, r, 0, 0)),
        ),
        compiler_params=pltpu.CompilerParams(
            dimension_semantics=("parallel", "parallel"),
            vmem_limit_bytes=vmem_limit),
    )(x_pp, w2, bias2)

    # ------------- pixel shuffle (depth-to-space) + crop, back to NCHW ---------
    y = y[:, :Hop, :Wop, :]
    y = y.reshape(G, N, Hop, Wop, s, s, Cout_g_pad)[..., :Cout_g]
    y = jnp.transpose(y, (1, 2, 4, 3, 5, 0, 6))        # (N, Hop, ph, Wop, pw, G, co)
    y = y.reshape(N, Hop * s, Wop * s, Cout)
    y = y[:, :Ho, :Wo, :]
    return jnp.transpose(y, (0, 3, 1, 2)).astype(out_dtype)


def conv_transpose2d_ref(x, weight, bias, *, stride, padding,
                         output_padding, groups):
    """Pure-JAX reference (XLA conv with lhs dilation) for correctness check."""
    Cin, Cout_g, K, _ = weight.shape
    G = groups
    Cin_g = Cin // G
    Cout = Cout_g * G
    rhs = weight.reshape(G, Cin_g, Cout_g, K, K).transpose(0, 2, 1, 3, 4)
    rhs = rhs.reshape(Cout, Cin_g, K, K)
    rhs = jnp.flip(rhs, axis=(2, 3))
    pad_lo = K - 1 - padding
    pad_hi = K - 1 - padding + output_padding
    out = lax.conv_general_dilated(
        x, rhs, window_strides=(1, 1),
        padding=[(pad_lo, pad_hi), (pad_lo, pad_hi)],
        lhs_dilation=(stride, stride),
        dimension_numbers=('NCHW', 'OIHW', 'NCHW'),
        feature_group_count=G,
        precision=lax.Precision.HIGHEST)
    return out + bias[None, :, None, None]


if __name__ == "__main__":
    key = jax.random.PRNGKey(0)
    kx, kw, kb = jax.random.split(key, 3)

    # Small, ConvTranspose2d-consistent shapes (typical SSD upsampling deconv).
    N, Cin, H, W = 2, 4, 16, 16
    Cout, K, stride, padding, output_padding, groups = 8, 3, 2, 1, 1, 1

    x = jax.random.normal(kx, (N, Cin, H, W), dtype=jnp.float32)
    weight = jax.random.normal(kw, (Cin, Cout // groups, K, K),
                               dtype=jnp.float32) * 0.1
    bias = jax.random.normal(kb, (Cout,), dtype=jnp.float32) * 0.1

    Ho = (H - 1) * stride - 2 * padding + K + output_padding
    Wo = (W - 1) * stride - 2 * padding + K + output_padding

    ref = conv_transpose2d_ref(x, weight, bias, stride=stride, padding=padding,
                               output_padding=output_padding, groups=groups)

    # 1) strict check: f32 compute path
    out_f32 = conv_transpose2d_pallas(
        x, weight, bias, stride=stride, padding=padding,
        output_padding=output_padding, groups=groups,
        compute_dtype=jnp.float32)
    out_f32 = jax.block_until_ready(out_f32)
    assert out_f32.shape == (N, Cout, Ho, Wo), out_f32.shape
    assert jnp.allclose(out_f32, ref, rtol=2e-3, atol=2e-3), (
        float(jnp.max(jnp.abs(out_f32 - ref))))

    # 2) fast path: default bf16 compute (f32 accumulation)
    out_bf16 = conv_transpose2d_pallas(
        x, weight, bias, stride=stride, padding=padding,
        output_padding=output_padding, groups=groups)
    out_bf16 = jax.block_until_ready(out_bf16)
    assert out_bf16.shape == (N, Cout, Ho, Wo), out_bf16.shape
    assert jnp.allclose(out_bf16, ref, rtol=2e-2, atol=2e-2), (
        float(jnp.max(jnp.abs(out_bf16 - ref))))

    # 3) grouped deconv path (per-group weight blocks, no dense block-diagonal)
    groups2 = 2
    weight_g = jax.random.normal(kw, (Cin, Cout // groups2, K, K),
                                 dtype=jnp.float32) * 0.1
    ref_g = conv_transpose2d_ref(x, weight_g, bias, stride=stride,
                                 padding=padding,
                                 output_padding=output_padding, groups=groups2)
    out_g = conv_transpose2d_pallas(
        x, weight_g, bias, stride=stride, padding=padding,
        output_padding=output_padding, groups=groups2)
    out_g = jax.block_until_ready(out_g)
    assert out_g.shape == (N, Cout, Ho, Wo), out_g.shape
    assert jnp.allclose(out_g, ref_g, rtol=2e-2, atol=2e-2), (
        float(jnp.max(jnp.abs(out_g - ref_g))))

    print("KERNEL_OK")
</pallas_src>

<mosaic_0001>
module attributes {stable_mosaic.version = 11 : i64} {
  func.func @_deconv_phase_kernel(%arg0: i32, %arg1: i32, %arg2: memref<1x17x17x4xf32, #tpu.memory_space<vmem>>, %arg3: memref<1x4x4x128xf32, #tpu.memory_space<vmem>>, %arg4: memref<1x1x128xf32, #tpu.memory_space<vmem>>, %arg5: memref<1x16x16x128xf32, #tpu.memory_space<vmem>>) attributes {dimension_semantics = [#tpu.dimension_semantics<parallel>, #tpu.dimension_semantics<parallel>], iteration_bounds = array<i64: 2, 1>, scalar_prefetch = 0 : i64, scratch_operands = 0 : i64, tpu.core_type = #tpu.core_type<tc>, window_params = [{transform_indices = @transform_0, window_bounds = array<i64: 1, 17, 17, 4>}, {pipeline_mode = #tpu.pipeline_mode<synchronous>, transform_indices = @transform_1, window_bounds = array<i64: 1, 4, 4, 128>}, {pipeline_mode = #tpu.pipeline_mode<synchronous>, transform_indices = @transform_2, window_bounds = array<i64: 1, 1, 128>}, {transform_indices = @transform_3, window_bounds = array<i64: 1, 16, 16, 128>}]} {
    %c16_i32 = arith.constant 16 : i32
    %0 = arith.muli %arg1, %c16_i32 : i32
    %1 = tpu.assume_multiple %0, 16 : i32
    %c0 = arith.constant 0 : index
    %c0_0 = arith.constant 0 : index
    %c0_1 = arith.constant 0 : index
    %2 = vector.load %arg4[%c0, %c0_0, %c0_1] : memref<1x1x128xf32, #tpu.memory_space<vmem>>, vector<1x1x128xf32>
    %3 = vector.shape_cast %2 : vector<1x1x128xf32> to vector<1x128xf32>
    %4 = vector.shape_cast %3 : vector<1x128xf32> to vector<1x128xf32>
    %5 = vector.broadcast %4 : vector<1x128xf32> to vector<256x128xf32>
    %c0_i32 = arith.constant 0 : i32
    %6 = arith.addi %1, %c0_i32 : i32
    %c0_2 = arith.constant 0 : index
    %7 = arith.index_cast %6 : i32 to index
    %c0_3 = arith.constant 0 : index
    %c0_4 = arith.constant 0 : index
    %8 = vector.load %arg2[%c0_2, %7, %c0_3, %c0_4] : memref<1x17x17x4xf32, #tpu.memory_space<vmem>>, vector<1x16x16x4xf32>
    %9 = vector.shape_cast %8 : vector<1x16x16x4xf32> to vector<16x16x4xf32>
    %10 = vector.shape_cast %9 : vector<16x16x4xf32> to vector<256x4xf32>
    %c0_5 = arith.constant 0 : index
    %c0_6 = arith.constant 0 : index
    %c0_7 = arith.constant 0 : index
    %c0_8 = arith.constant 0 : index
    %11 = vector.load %arg3[%c0_5, %c0_6, %c0_7, %c0_8] : memref<1x4x4x128xf32, #tpu.memory_space<vmem>>, vector<1x1x4x128xf32>
    %12 = vector.shape_cast %11 : vector<1x1x4x128xf32> to vector<4x128xf32>
    %cst = arith.constant dense<0.000000e+00> : vector<256x128xf32>
    %13 = tpu.matmul %10, %12, %cst {dimension_numbers = #tpu.dot_dimension_numbers<[1], [0], [0], [1], [0, 0, 1, 1], [], []>} : vector<256x4xf32>, vector<4x128xf32>, vector<256x128xf32> -> vector<256x128xf32>
    %14 = arith.addf %5, %13 : vector<256x128xf32>
    %c0_i32_9 = arith.constant 0 : i32
    %15 = arith.addi %1, %c0_i32_9 : i32
    %c0_10 = arith.constant 0 : index
    %16 = arith.index_cast %15 : i32 to index
    %c1 = arith.constant 1 : index
    %c0_11 = arith.constant 0 : index
    %17 = vector.load %arg2[%c0_10, %16, %c1, %c0_11] : memref<1x17x17x4xf32, #tpu.memory_space<vmem>>, vector<1x16x16x4xf32>
    %18 = vector.shape_cast %17 : vector<1x16x16x4xf32> to vector<16x16x4xf32>
    %19 = vector.shape_cast %18 : vector<16x16x4xf32> to vector<256x4xf32>
    %c0_12 = arith.constant 0 : index
    %c1_13 = arith.constant 1 : index
    %c0_14 = arith.constant 0 : index
    %c0_15 = arith.constant 0 : index
    %20 = vector.load %arg3[%c0_12, %c1_13, %c0_14, %c0_15] : memref<1x4x4x128xf32, #tpu.memory_space<vmem>>, vector<1x1x4x128xf32>
    %21 = vector.shape_cast %20 : vector<1x1x4x128xf32> to vector<4x128xf32>
    %cst_16 = arith.constant dense<0.000000e+00> : vector<256x128xf32>
    %22 = tpu.matmul %19, %21, %cst_16 {dimension_numbers = #tpu.dot_dimension_numbers<[1], [0], [0], [1], [0, 0, 1, 1], [], []>} : vector<256x4xf32>, vector<4x128xf32>, vector<256x128xf32> -> vector<256x128xf32>
    %23 = arith.addf %14, %22 : vector<256x128xf32>
    %c1_i32 = arith.constant 1 : i32
    %24 = arith.addi %1, %c1_i32 : i32
    %c0_17 = arith.constant 0 : index
    %25 = arith.index_cast %24 : i32 to index
    %c0_18 = arith.constant 0 : index
    %c0_19 = arith.constant 0 : index
    %26 = vector.load %arg2[%c0_17, %25, %c0_18, %c0_19] : memref<1x17x17x4xf32, #tpu.memory_space<vmem>>, vector<1x16x16x4xf32>
    %27 = vector.shape_cast %26 : vector<1x16x16x4xf32> to vector<16x16x4xf32>
    %28 = vector.shape_cast %27 : vector<16x16x4xf32> to vector<256x4xf32>
    %c0_20 = arith.constant 0 : index
    %c2 = arith.constant 2 : index
    %c0_21 = arith.constant 0 : index
    %c0_22 = arith.constant 0 : index
    %29 = vector.load %arg3[%c0_20, %c2, %c0_21, %c0_22] : memref<1x4x4x128xf32, #tpu.memory_space<vmem>>, vector<1x1x4x128xf32>
    %30 = vector.shape_cast %29 : vector<1x1x4x128xf32> to vector<4x128xf32>
    %cst_23 = arith.constant dense<0.000000e+00> : vector<256x128xf32>
    %31 = tpu.matmul %28, %30, %cst_23 {dimension_numbers = #tpu.dot_dimension_numbers<[1], [0], [0], [1], [0, 0, 1, 1], [], []>} : vector<256x4xf32>, vector<4x128xf32>, vector<256x128xf32> -> vector<256x128xf32>
    %32 = arith.addf %23, %31 : vector<256x128xf32>
    %c1_i32_24 = arith.constant 1 : i32
    %33 = arith.addi %1, %c1_i32_24 : i32
    %c0_25 = arith.constant 0 : index
    %34 = arith.index_cast %33 : i32 to index
    %c1_26 = arith.constant 1 : index
    %c0_27 = arith.constant 0 : index
    %35 = vector.load %arg2[%c0_25, %34, %c1_26, %c0_27] : memref<1x17x17x4xf32, #tpu.memory_space<vmem>>, vector<1x16x16x4xf32>
    %36 = vector.shape_cast %35 : vector<1x16x16x4xf32> to vector<16x16x4xf32>
    %37 = vector.shape_cast %36 : vector<16x16x4xf32> to vector<256x4xf32>
    %c0_28 = arith.constant 0 : index
    %c3 = arith.constant 3 : index
    %c0_29 = arith.constant 0 : index
    %c0_30 = arith.constant 0 : index
    %38 = vector.load %arg3[%c0_28, %c3, %c0_29, %c0_30] : memref<1x4x4x128xf32, #tpu.memory_space<vmem>>, vector<1x1x4x128xf32>
    %39 = vector.shape_cast %38 : vector<1x1x4x128xf32> to vector<4x128xf32>
    %cst_31 = arith.constant dense<0.000000e+00> : vector<256x128xf32>
    %40 = tpu.matmul %37, %39, %cst_31 {dimension_numbers = #tpu.dot_dimension_numbers<[1], [0], [0], [1], [0, 0, 1, 1], [], []>} : vector<256x4xf32>, vector<4x128xf32>, vector<256x128xf32> -> vector<256x128xf32>
    %41 = arith.addf %32, %40 : vector<256x128xf32>
    %42 = vector.shape_cast %41 : vector<256x128xf32> to vector<16x16x128xf32>
    %c0_32 = arith.constant 0 : index
    %c0_33 = arith.constant 0 : index
    %c0_34 = arith.constant 0 : index
    %c0_35 = arith.constant 0 : index
    %43 = vector.load %arg5[%c0_32, %c0_33, %c0_34, %c0_35] : memref<1x16x16x128xf32, #tpu.memory_space<vmem>>, vector<1x16x16x128xf32>
    %44 = vector.shape_cast %43 : vector<1x16x16x128xf32> to vector<16x16x128xf32>
    %45 = vector.shape_cast %42 : vector<16x16x128xf32> to vector<1x16x16x128xf32>
    tpu.vector_store %arg5[%c0_32, %c0_33, %c0_34, %c0_35], %45 {strides = array<i32>} : memref<1x16x16x128xf32, #tpu.memory_space<vmem>>, vector<1x16x16x128xf32>,
    return
  }
  func.func @transform_0(%arg0: i32, %arg1: i32) -> (i32, i32, i32, i32) {
    %c0_i32 = arith.constant 0 : i32
    %c0_i32_0 = arith.constant 0 : i32
    %c0_i32_1 = arith.constant 0 : i32
    %c0_i32_2 = arith.constant 0 : i32
    return %arg0, %c0_i32, %c0_i32_0, %c0_i32_1 : i32, i32, i32, i32
  }
  func.func @transform_1(%arg0: i32, %arg1: i32) -> (i32, i32, i32, i32) {
    %c0_i32 = arith.constant 0 : i32
    %c0_i32_0 = arith.constant 0 : i32
    %c0_i32_1 = arith.constant 0 : i32
    %c0_i32_2 = arith.constant 0 : i32
    %c0_i32_3 = arith.constant 0 : i32
    return %c0_i32, %c0_i32_0, %c0_i32_1, %c0_i32_2 : i32, i32, i32, i32
  }
  func.func @transform_2(%arg0: i32, %arg1: i32) -> (i32, i32, i32) {
    %c0_i32 = arith.constant 0 : i32
    %c0_i32_0 = arith.constant 0 : i32
    %c0_i32_1 = arith.constant 0 : i32
    %c0_i32_2 = arith.constant 0 : i32
    return %c0_i32, %c0_i32_0, %c0_i32_1 : i32, i32, i32
  }
  func.func @transform_3(%arg0: i32, %arg1: i32) -> (i32, i32, i32, i32) {
    %c0_i32 = arith.constant 0 : i32
    %c0_i32_0 = arith.constant 0 : i32
    %c0_i32_1 = arith.constant 0 : i32
    return %arg0, %arg1, %c0_i32, %c0_i32_0 : i32, i32, i32, i32
  }
}

</mosaic_0001>

<llo_original>
// kernel: tpu_custom_call.1
$region0: #{tpu_custom_call.1}
  #allocation0 [shape = 'u32[]', space=smem, size = 0x4, offset = 0x4, fixed_abs, tag = 'smem constant byte address 0x4 - core index']
  #allocation1 [shape = 'u32[144,128]{1,0:T(1,128)}', space=vmem, size = 0x12000, scoped, tag = 'internal scratch']
  %s0 = inlined_call_operand.vmem [shape: f32[2,17,17,4], index: 0, kind: input, shape index: {}]
  %s1 = inlined_call_operand.vmem [shape: f32[1,4,4,128], index: 1, kind: input, shape index: {}]
  %s2 = inlined_call_operand.vmem [shape: f32[1,1,128], index: 2, kind: input, shape index: {}]
  %s3 = inlined_call_operand.hbm [shape: f32[2,16,16,128], index: 3, kind: output, shape index: {}]
  %s4 = sld [smem:[#allocation0]]
  $region45: #{tpu_custom_call.1} parent=0
    _
  %s6 = ssub.s32 1, %s4
  %s7 = scalar_select 0, %s6, %s4
  $region1: #{tpu_custom_call.1} parent=0
    #allocation2 [shape = 'u8[262144]{0}', space=vmem, size = 0x40000, scoped, tag = 'output window, operand 0']
    #allocation3 [shape = 's32[2]{0}', space=sflag, size = 0x8, scoped, tag = 'scoped memory for tpu_custom_call.1']
    %8 = vsyncpa [#allocation3], 0
    %s9 = scalar_lea.sflag [#allocation3], 1
    %10 = vsyncpa %s9, 0
    loop: start=0, step=1, limit=4
    $region2: #{tpu_custom_call.1} parent=1 // loop_pre_header
      _
    $region3: #{tpu_custom_call.1} parent=1 // loop_header
      %s12 = sphi 0, %s16
      %p13 = scmp.ge.s32.totalorder %s12, 4
      %s19 = sphi 0, %s31
      %s20 = sphi 0, %s27
      %s21 = sphi 0, %s19
      %s22 = sphi 0, %s20
      %s23 = sphi 0, %s21
      %s24 = sphi 0, %s22
      %s34 = sphi 0, %s36
      %s37 = sphi 0, %s34
      %s38 = sphi 0, %s37
      %s54 = sphi 0, %s38
      %s58 = sphi 0, %s58
      %s60 = sphi 0, %s58
      %s61 = sphi 0, %s60
      %s75 = sphi 0, %s61
      %s79 = sphi 0, %s79
      %s81 = sphi 0, %s79
      %s82 = sphi 0, %s81
      %s96 = sphi 0, %s82
      %s104 = sphi 0, %s106
      %s107 = sphi 0, %s104
      %s108 = sphi 0, %s107
      %s124 = sphi 0, %s108
    $region4: #{tpu_custom_call.1} parent=1 // loop_header_branch
      %15 = sbr.rel (%p13) target = $region8
    $region5: #{tpu_custom_call.1} parent=1 // loop_body
      %s17 = ssub.s32 %s12, 1
      %s18 = ssub.s32 %s12, 2
      %s25 = sadd.s32 1, %s20
      %p26 = scmp.ge.s32.totalorder %s25, 1
      %s27 = scalar_select %p26, 0, %s25
      %s28 = sadd.s32 1, %s19
      %s29 = scalar_select %p26, %s28, %s19
      %p30 = scmp.ge.s32.totalorder %s29, 2
      %s31 = scalar_select %p30, 0, %s29
      %s32 = ssub.s32 %s19, %s31
      %p33 = scmp.eq.s32.totalorder %s32, 0
      %s35 = sadd.s32 %s34, 1
      %s36 = scalar_select %p33, %s34, %s35
      %p39 = pneg %p33
      %p40 = scmp.eq.s32.totalorder %s12, 1
      %p41 = por %p39, %p40
      %p42 = scmp.ne.s32.totalorder %s34, %s37
      %p43 = scmp.eq.s32.totalorder %s12, 0
      %p44 = por %p42, %p43
      %p45 = scmp.ne.s32.totalorder %s34, %s37
      %p46 = scmp.eq.s32.totalorder %s17, 1
      %p47 = por %p45, %p46
      %p48 = scmp.ne.s32.totalorder %s37, %s38
      %p49 = scmp.eq.s32.totalorder %s17, 0
      %p50 = por %p48, %p49
      %p51 = scmp.ne.s32.totalorder %s37, %s38
      %p52 = scmp.eq.s32.totalorder %s18, 1
      %p53 = por %p51, %p52
      %p55 = scmp.ne.s32.totalorder %s38, %s54
      %p56 = scmp.eq.s32.totalorder %s18, 0
      %p57 = por %p55, %p56
      %s59 = sadd.s32 %s58, 1
      %p62 = scmp.eq.s32.totalorder %s12, 1
      %p63 = scmp.ne.s32.totalorder %s58, %s60
      %p64 = scmp.eq.s32.totalorder %s12, 0
      %p65 = por %p63, %p64
      %p66 = scmp.ne.s32.totalorder %s58, %s60
      %p67 = scmp.eq.s32.totalorder %s17, 1
      %p68 = por %p66, %p67
      %p69 = scmp.ne.s32.totalorder %s60, %s61
      %p70 = scmp.eq.s32.totalorder %s17, 0
      %p71 = por %p69, %p70
      %p72 = scmp.ne.s32.totalorder %s60, %s61
      %p73 = scmp.eq.s32.totalorder %s18, 1
      %p74 = por %p72, %p73
      %p76 = scmp.ne.s32.totalorder %s61, %s75
      %p77 = scmp.eq.s32.totalorder %s18, 0
      %p78 = por %p76, %p77
      %s80 = sadd.s32 %s79, 1
      %p83 = scmp.eq.s32.totalorder %s12, 1
      %p84 = scmp.ne.s32.totalorder %s79, %s81
      %p85 = scmp.eq.s32.totalorder %s12, 0
      %p86 = por %p84, %p85
      %p87 = scmp.ne.s32.totalorder %s79, %s81
      %p88 = scmp.eq.s32.totalorder %s17, 1
      %p89 = por %p87, %p88
      %p90 = scmp.ne.s32.totalorder %s81, %s82
      %p91 = scmp.eq.s32.totalorder %s17, 0
      %p92 = por %p90, %p91
      %p93 = scmp.ne.s32.totalorder %s81, %s82
      %p94 = scmp.eq.s32.totalorder %s18, 1
      %p95 = por %p93, %p94
      %p97 = scmp.ne.s32.totalorder %s82, %s96
      %p98 = scmp.eq.s32.totalorder %s18, 0
      %p99 = por %p97, %p98
      %s100 = ssub.s32 %s19, %s31
      %s101 = ssub.s32 %s20, %s27
      %s102 = sor.u32 %s100, %s101
      %p103 = scmp.eq.s32.totalorder %s102, 0
      %s105 = sadd.s32 %s104, 1
      %s106 = scalar_select %p103, %s104, %s105
      %p109 = pneg %p103
      %p110 = scmp.eq.s32.totalorder %s12, 1
      %p111 = por %p109, %p110
      %p112 = scmp.ne.s32.totalorder %s104, %s107
      %p113 = scmp.eq.s32.totalorder %s12, 0
      %p114 = por %p112, %p113
      %p115 = scmp.ne.s32.totalorder %s104, %s107
      %p116 = scmp.eq.s32.totalorder %s17, 1
      %p117 = por %p115, %p116
      %p118 = scmp.ne.s32.totalorder %s107, %s108
      %p119 = scmp.eq.s32.totalorder %s17, 0
      %p120 = por %p118, %p119
      %p121 = scmp.ne.s32.totalorder %s107, %s108
      %p122 = scmp.eq.s32.totalorder %s18, 1
      %p123 = por %p121, %p122
      %p125 = scmp.ne.s32.totalorder %s108, %s124
      %p126 = scmp.eq.s32.totalorder %s18, 0
      %p127 = por %p125, %p126
      %p128 = scmp.le.s32.totalorder 1, %s12
      %p129 = scmp.lt.s32.totalorder %s12, 3
      %p130 = pnand %p128, %p129
      %p131 = pneg %p130
      // Predicated region
      $region9: #{tpu_custom_call.1} parent=5 // pred_check
        _
      $region10: #{tpu_custom_call.1} parent=5 // pred_check_branch
        %133 = sbr.rel (%p130) target = $region12
      $region11: #{tpu_custom_call.1} parent=5 // pred_region
        %s134 = ssub.s32 %s12, 1
        // Predicated region
        $region13: #{tpu_custom_call.1} parent=11 // pred_check
          %p135 = pneg %p71
        $region14: #{tpu_custom_call.1} parent=11 // pred_check_branch
          %137 = sbr.rel (%p135) target = $region16
        $region15: #{tpu_custom_call.1} parent=11 // pred_region
          _
        $region16: #{tpu_custom_call.1} parent=11 // pred_fallthru
          _
        // Predicated region
        $region17: #{tpu_custom_call.1} parent=11 // pred_check
          %p138 = pneg %p92
        $region18: #{tpu_custom_call.1} parent=11 // pred_check_branch
          %140 = sbr.rel (%p138) target = $region20
        $region19: #{tpu_custom_call.1} parent=11 // pred_region
          _
        $region20: #{tpu_custom_call.1} parent=11 // pred_fallthru
          _
      $region12: #{tpu_custom_call.1} parent=5 // pred_fallthru
        _
      %p141 = scmp.lt.s32.totalorder %s12, 2
      // Predicated region
      $region21: #{tpu_custom_call.1} parent=5 // pred_check
        %p142 = pneg %p141
      $region22: #{tpu_custom_call.1} parent=5 // pred_check_branch
        %144 = sbr.rel (%p142) target = $region24
      $region23: #{tpu_custom_call.1} parent=5 // pred_region
        // Predicated region
        $region25: #{tpu_custom_call.1} parent=23 // pred_check
          %p145 = pneg %p44
        $region26: #{tpu_custom_call.1} parent=23 // pred_check_branch
          %147 = sbr.rel (%p145) target = $region28
        $region27: #{tpu_custom_call.1} parent=23 // pred_region
          %p148 = scmp.lt.s32.totalorder %s19, 1
          %s149 = scalar_select %p148, %s19, 1
          %s150 = smul.addr %s149, 51
          %s151 = smul.addr %s150, 8
          %s152 = scalar_lea.vmem %s0, %s151
        $region28: #{tpu_custom_call.1} parent=23 // pred_fallthru
          _
      $region24: #{tpu_custom_call.1} parent=5 // pred_fallthru
        _
      %p153 = scmp.le.s32.totalorder 1, %s12
      %p154 = scmp.lt.s32.totalorder %s12, 3
      %p155 = pnand %p153, %p154
      %p156 = pneg %p155
      // Predicated region
      $region29: #{tpu_custom_call.1} parent=5 // pred_check
        _
      $region30: #{tpu_custom_call.1} parent=5 // pred_check_branch
        %158 = sbr.rel (%p155) target = $region32
      $region31: #{tpu_custom_call.1} parent=5 // pred_region
        %s159 = ssub.s32 %s12, 1
        %p160 = scmp.lt.s32.totalorder %s21, 1
        %s161 = scalar_select %p160, %s21, 1
        %s162 = smul.addr %s161, 51
        %s163 = smul.addr %s162, 8
        %s164 = scalar_lea.vmem %s0, %s163
        %p165 = pneg %p50
        %p166 = pneg %p47
        %p167 = pneg %p71
        %p168 = pneg %p68
        %p169 = pneg %p92
        %p170 = pneg %p89
        %p171 = pneg %p120
        %p172 = pneg %p117
        %s173 = sand.u32 %s107, 1
        %s174 = scalar_lea.sflag [#allocation3], %s173
        %s175 = sand.u32 %s107, 1
        %s176 = smul.addr %s175, 256
        %s177 = scalar_lea.vmem [#allocation2], %s176
        %p178 = scmp.lt.s32.totalorder %s21, 1
        %s179 = scalar_select %p178, %s21, 1
        %s180 = smul.addr %s179, 51
        %s181 = smul.addr %s180, 8
        %s182 = scalar_lea.vmem %s0, %s181
        %s183 = smul.u32 16, %s22
        %s184 = smul.u32 %s22, 16
        %v185 = vld [vmem:[%s2] sm:$0x1]
        %v187 = vlaneseq
        %v188 = vshrl.u32 %v187, 7
        %v189 = vsub.s32 0, %v188
        %v190 = vrot.slane %v185, %v189
        %s192 = smul.u32 %s184, 24
        %s193 = scalar_lea.vmem %s182, %s192
        %v194 = vld [vmem:[%s193] sm:$0xff]
        %v195 = vld [vmem:[%s193 + $0x8] sm:$0xff]
        %v196 = vld [vmem:[%s193 + $0x18] sm:$0xff]
        %v197 = vld [vmem:[%s193 + $0x20] sm:$0xff]
        %v198 = vld [vmem:[%s193 + $0x30] sm:$0xff]
        %v199 = vld [vmem:[%s193 + $0x38] sm:$0xff]
        %v200 = vld [vmem:[%s193 + $0x48] sm:$0xff]
        %v201 = vld [vmem:[%s193 + $0x50] sm:$0xff]
        %v202 = vld [vmem:[%s193 + $0x60] sm:$0xff]
        %v203 = vld [vmem:[%s193 + $0x68] sm:$0xff]
        %v204 = vld [vmem:[%s193 + $0x78] sm:$0xff]
        %v205 = vld [vmem:[%s193 + $0x80] sm:$0xff]
        %v206 = vld [vmem:[%s193 + $0x90] sm:$0xff]
        %v207 = vld [vmem:[%s193 + $0x98] sm:$0xff]
        %v208 = vld [vmem:[%s193 + $0xa8] sm:$0xff]
        %v209 = vld [vmem:[%s193 + $0xb0] sm:$0xff]
        %v210 = vld [vmem:[%s193 + $0xc0] sm:$0xff]
        %v211 = vld [vmem:[%s193 + $0xc8] sm:$0xff]
        %v212 = vld [vmem:[%s193 + $0xd8] sm:$0xff]
        %v213 = vld [vmem:[%s193 + $0xe0] sm:$0xff]
        %v214 = vld [vmem:[%s193 + $0xf0] sm:$0xff]
        %v215 = vld [vmem:[%s193 + $0xf8] sm:$0xff]
        %v216 = vld [vmem:[%s193 + $0x108] sm:$0xff]
        %v217 = vld [vmem:[%s193 + $0x110] sm:$0xff]
        %v218 = vld [vmem:[%s193 + $0x120] sm:$0xff]
        %v219 = vld [vmem:[%s193 + $0x128] sm:$0xff]
        %v220 = vld [vmem:[%s193 + $0x138] sm:$0xff]
        %v221 = vld [vmem:[%s193 + $0x140] sm:$0xff]
        %v222 = vld [vmem:[%s193 + $0x150] sm:$0xff]
        %v223 = vld [vmem:[%s193 + $0x158] sm:$0xff]
        %v224 = vld [vmem:[%s193 + $0x168] sm:$0xff]
        %v225 = vld [vmem:[%s193 + $0x170] sm:$0xff]
        %v226 = vld [vmem:[%s1] sm:$0xf]
        %vm227 = vcmask 31744
        %v229 = vsel %vm227, %v194, 0
        %v232 = vsel %vm227, %v195, 0
        %v235 = vsel %vm227, %v196, 0
        %v238 = vsel %vm227, %v197, 0
        %v241 = vsel %vm227, %v198, 0
        %v244 = vsel %vm227, %v199, 0
        %v247 = vsel %vm227, %v200, 0
        %v250 = vsel %vm227, %v201, 0
        %v253 = vsel %vm227, %v202, 0
        %v256 = vsel %vm227, %v203, 0
        %v259 = vsel %vm227, %v204, 0
        %v262 = vsel %vm227, %v205, 0
        %v265 = vsel %vm227, %v206, 0
        %v268 = vsel %vm227, %v207, 0
        %v271 = vsel %vm227, %v208, 0
        %v274 = vsel %vm227, %v209, 0
        %v277 = vsel %vm227, %v210, 0
        %v280 = vsel %vm227, %v211, 0
        %v283 = vsel %vm227, %v212, 0
        %v286 = vsel %vm227, %v213, 0
        %v289 = vsel %vm227, %v214, 0
        %v292 = vsel %vm227, %v215, 0
        %v295 = vsel %vm227, %v216, 0
        %v298 = vsel %vm227, %v217, 0
        %v301 = vsel %vm227, %v218, 0
        %v304 = vsel %vm227, %v219, 0
        %v307 = vsel %vm227, %v220, 0
        %v310 = vsel %vm227, %v221, 0
        %v313 = vsel %vm227, %v222, 0
        %v316 = vsel %vm227, %v223, 0
        %v319 = vsel %vm227, %v224, 0
        %v322 = vsel %vm227, %v225, 0
        %vm324 = vcmask 1043456
        %v326 = vsel %vm324, %v226, 0
        %328 = vmatprep.subr.mxu0 0.0
        %329 = vmatpush1.msra.mxu0 0.0
        %330 = vmatprep.subr.mxu0 0.0
        %331 = vmatpush1.msra.mxu0 0.0
        %332 = vmatprep.subr.mxu0 0.0
        %333 = vmatpush1.msra.mxu0 0.0
        %334 = vmatprep.subr.mxu0 0.0
        %335 = vmatpush1.msra.mxu0 0.0
        %336 = vmatprep.subr.mxu0 0.0
        %337 = vmatpush1.msra.mxu0 0.0
        %338 = vmatprep.subr.mxu0 0.0
        %339 = vmatpush1.msra.mxu0 0.0
        %340 = vmatprep.subr.mxu0 0.0
        %341 = vmatpush1.msra.mxu0 0.0
        %342 = vmatprep.subr.mxu0 0.0
        %343 = vmatpush1.msra.mxu0 0.0
        %344 = vmatprep.subr.mxu0 0.0
        %345 = vmatpush1.msra.mxu0 0.0
        %346 = vmatprep.subr.mxu0 0.0
        %347 = vmatpush1.msra.mxu0 0.0
        %348 = vmatprep.subr.mxu0 0.0
        %349 = vmatpush1.msra.mxu0 0.0
        %350 = vmatprep.subr.mxu0 0.0
        %351 = vmatpush1.msra.mxu0 0.0
        %352 = vmatprep.subr.mxu0 0.0
        %353 = vmatpush1.msra.mxu0 0.0
        %354 = vmatprep.subr.mxu0 0.0
        %355 = vmatpush1.msra.mxu0 0.0
        %356 = vmatprep.subr.mxu0 0.0
        %357 = vmatpush1.msra.mxu0 0.0
        %358 = vmatprep.subr.mxu0 0.0
        %359 = vmatpush1.msra.mxu0 %v326
        %360 = vmatprep.subr.mxu0 0.0
        %361 = vmatpush2.msra.mxu0 0.0
        %362 = vmatprep.subr.mxu0 0.0
        %363 = vmatpush2.msra.mxu0 0.0
        %364 = vmatprep.subr.mxu0 0.0
        %365 = vmatpush2.msra.mxu0 0.0
        %366 = vmatprep.subr.mxu0 0.0
        %367 = vmatpush2.msra.mxu0 0.0
        %368 = vmatprep.subr.mxu0 0.0
        %369 = vmatpush2.msra.mxu0 0.0
        %370 = vmatprep.subr.mxu0 0.0
        %371 = vmatpush2.msra.mxu0 0.0
        %372 = vmatprep.subr.mxu0 0.0
        %373 = vmatpush2.msra.mxu0 0.0
        %374 = vmatprep.subr.mxu0 0.0
        %375 = vmatpush2.msra.mxu0 0.0
        %376 = vmatprep.subr.mxu0 0.0
        %377 = vmatpush2.msra.mxu0 0.0
        %378 = vmatprep.subr.mxu0 0.0
        %379 = vmatpush2.msra.mxu0 0.0
        %380 = vmatprep.subr.mxu0 0.0
        %381 = vmatpush2.msra.mxu0 0.0
        %382 = vmatprep.subr.mxu0 0.0
        %383 = vmatpush2.msra.mxu0 0.0
        %384 = vmatprep.subr.mxu0 0.0
        %385 = vmatpush2.msra.mxu0 0.0
        %386 = vmatprep.subr.mxu0 0.0
        %387 = vmatpush2.msra.mxu0 0.0
        %388 = vmatprep.subr.mxu0 0.0
        %389 = vmatpush2.msra.mxu0 0.0
        %390 = vmatprep.subr.mxu0 0.0
        %391 = vmatpush2.msra.mxu0 0.0
        %392 = vmatprep.mubr.f32.mxu0 0.0
        %393 = vmatmul.mubr.f32.gmra.mxu0 %v229
        %v394 = vpop.f32.mrf.mxu0
        %v395 = vadd.f32 0.0, %v394
        %v396 = vpop.f32.mrf.mxu0
        %397 = vmatprep.mubr.f32.mxu0 0.0
        %398 = vmatmul.mubr.f32.gmra.mxu0 %v232
        %v399 = vpop.f32.mrf.mxu0
        %v400 = vadd.f32 0.0, %v399
        %v401 = vpop.f32.mrf.mxu0
        %402 = vmatprep.mubr.f32.mxu0 0.0
        %403 = vmatmul.mubr.f32.gmra.mxu0 %v235
        %v404 = vpop.f32.mrf.mxu0
        %v405 = vadd.f32 0.0, %v404
        %v406 = vpop.f32.mrf.mxu0
        %407 = vmatprep.mubr.f32.mxu0 0.0
        %408 = vmatmul.mubr.f32.gmra.mxu0 %v238
        %v409 = vpop.f32.mrf.mxu0
        %v410 = vadd.f32 0.0, %v409
        %v411 = vpop.f32.mrf.mxu0
        %412 = vmatprep.mubr.f32.mxu0 0.0
        %413 = vmatmul.mubr.f32.gmra.mxu0 %v241
        %v414 = vpop.f32.mrf.mxu0
        %v415 = vadd.f32 0.0, %v414
        %v416 = vpop.f32.mrf.mxu0
        %417 = vmatprep.mubr.f32.mxu0 0.0
        %418 = vmatmul.mubr.f32.gmra.mxu0 %v244
        %v419 = vpop.f32.mrf.mxu0
        %v420 = vadd.f32 0.0, %v419
        %v421 = vpop.f32.mrf.mxu0
        %422 = vmatprep.mubr.f32.mxu0 0.0
        %423 = vmatmul.mubr.f32.gmra.mxu0 %v247
        %v424 = vpop.f32.mrf.mxu0
        %v425 = vadd.f32 0.0, %v424
        %v426 = vpop.f32.mrf.mxu0
        %427 = vmatprep.mubr.f32.mxu0 0.0
        %428 = vmatmul.mubr.f32.gmra.mxu0 %v250
        %v429 = vpop.f32.mrf.mxu0
        %v430 = vadd.f32 0.0, %v429
        %v431 = vpop.f32.mrf.mxu0
        %432 = vmatprep.mubr.f32.mxu0 0.0
        %433 = vmatmul.mubr.f32.gmra.mxu0 %v253
        %v434 = vpop.f32.mrf.mxu0
        %v435 = vadd.f32 0.0, %v434
        %v436 = vpop.f32.mrf.mxu0
        %437 = vmatprep.mubr.f32.mxu0 0.0
        %438 = vmatmul.mubr.f32.gmra.mxu0 %v256
        %v439 = vpop.f32.mrf.mxu0
        %v440 = vadd.f32 0.0, %v439
        %v441 = vpop.f32.mrf.mxu0
        %442 = vmatprep.mubr.f32.mxu0 0.0
        %443 = vmatmul.mubr.f32.gmra.mxu0 %v259
        %v444 = vpop.f32.mrf.mxu0
        %v445 = vadd.f32 0.0, %v444
        %v446 = vpop.f32.mrf.mxu0
        %447 = vmatprep.mubr.f32.mxu0 0.0
        %448 = vmatmul.mubr.f32.gmra.mxu0 %v262
        %v449 = vpop.f32.mrf.mxu0
        %v450 = vadd.f32 0.0, %v449
        %v451 = vpop.f32.mrf.mxu0
        %452 = vmatprep.mubr.f32.mxu0 0.0
        %453 = vmatmul.mubr.f32.gmra.mxu0 %v265
        %v454 = vpop.f32.mrf.mxu0
        %v455 = vadd.f32 0.0, %v454
        %v456 = vpop.f32.mrf.mxu0
        %457 = vmatprep.mubr.f32.mxu0 0.0
        %458 = vmatmul.mubr.f32.gmra.mxu0 %v268
        %v459 = vpop.f32.mrf.mxu0
        %v460 = vadd.f32 0.0, %v459
        %v461 = vpop.f32.mrf.mxu0
        %462 = vmatprep.mubr.f32.mxu0 0.0
        %463 = vmatmul.mubr.f32.gmra.mxu0 %v271
        %v464 = vpop.f32.mrf.mxu0
        %v465 = vadd.f32 0.0, %v464
        %v466 = vpop.f32.mrf.mxu0
        %467 = vmatprep.mubr.f32.mxu0 0.0
        %468 = vmatmul.mubr.f32.gmra.mxu0 %v274
        %v469 = vpop.f32.mrf.mxu0
        %v470 = vadd.f32 0.0, %v469
        %v471 = vpop.f32.mrf.mxu0
        %472 = vmatprep.mubr.f32.mxu0 0.0
        %473 = vmatmul.mubr.f32.gmra.mxu0 %v277
        %v474 = vpop.f32.mrf.mxu0
        %v475 = vadd.f32 0.0, %v474
        %v476 = vpop.f32.mrf.mxu0
        %477 = vmatprep.mubr.f32.mxu0 0.0
        %478 = vmatmul.mubr.f32.gmra.mxu0 %v280
        %v479 = vpop.f32.mrf.mxu0
        %v480 = vadd.f32 0.0, %v479
        %v481 = vpop.f32.mrf.mxu0
        %482 = vmatprep.mubr.f32.mxu0 0.0
        %483 = vmatmul.mubr.f32.gmra.mxu0 %v283
        %v484 = vpop.f32.mrf.mxu0
        %v485 = vadd.f32 0.0, %v484
        %v486 = vpop.f32.mrf.mxu0
        %487 = vmatprep.mubr.f32.mxu0 0.0
        %488 = vmatmul.mubr.f32.gmra.mxu0 %v286
        %v489 = vpop.f32.mrf.mxu0
        %v490 = vadd.f32 0.0, %v489
        %v491 = vpop.f32.mrf.mxu0
        %492 = vmatprep.mubr.f32.mxu0 0.0
        %493 = vmatmul.mubr.f32.gmra.mxu0 %v289
        %v494 = vpop.f32.mrf.mxu0
        %v495 = vadd.f32 0.0, %v494
        %v496 = vpop.f32.mrf.mxu0
        %497 = vmatprep.mubr.f32.mxu0 0.0
        %498 = vmatmul.mubr.f32.gmra.mxu0 %v292
        %v499 = vpop.f32.mrf.mxu0
        %v500 = vadd.f32 0.0, %v499
        %v501 = vpop.f32.mrf.mxu0
        %502 = vmatprep.mubr.f32.mxu0 0.0
        %503 = vmatmul.mubr.f32.gmra.mxu0 %v295
        %v504 = vpop.f32.mrf.mxu0
        %v505 = vadd.f32 0.0, %v504
        %v506 = vpop.f32.mrf.mxu0
        %507 = vmatprep.mubr.f32.mxu0 0.0
        %508 = vmatmul.mubr.f32.gmra.mxu0 %v298
        %v509 = vpop.f32.mrf.mxu0
        %v510 = vadd.f32 0.0, %v509
        %v511 = vpop.f32.mrf.mxu0
        %512 = vmatprep.mubr.f32.mxu0 0.0
        %513 = vmatmul.mubr.f32.gmra.mxu0 %v301
        %v514 = vpop.f32.mrf.mxu0
        %v515 = vadd.f32 0.0, %v514
        %v516 = vpop.f32.mrf.mxu0
        %517 = vmatprep.mubr.f32.mxu0 0.0
        %518 = vmatmul.mubr.f32.gmra.mxu0 %v304
        %v519 = vpop.f32.mrf.mxu0
        %v520 = vadd.f32 0.0, %v519
        %v521 = vpop.f32.mrf.mxu0
        %522 = vmatprep.mubr.f32.mxu0 0.0
        %523 = vmatmul.mubr.f32.gmra.mxu0 %v307
        %v524 = vpop.f32.mrf.mxu0
        %v525 = vadd.f32 0.0, %v524
        %v526 = vpop.f32.mrf.mxu0
        %527 = vmatprep.mubr.f32.mxu0 0.0
        %528 = vmatmul.mubr.f32.gmra.mxu0 %v310
        %v529 = vpop.f32.mrf.mxu0
        %v530 = vadd.f32 0.0, %v529
        %v531 = vpop.f32.mrf.mxu0
        %532 = vmatprep.mubr.f32.mxu0 0.0
        %533 = vmatmul.mubr.f32.gmra.mxu0 %v313
        %v534 = vpop.f32.mrf.mxu0
        %v535 = vadd.f32 0.0, %v534
        %v536 = vpop.f32.mrf.mxu0
        %537 = vmatprep.mubr.f32.mxu0 0.0
        %538 = vmatmul.mubr.f32.gmra.mxu0 %v316
        %v539 = vpop.f32.mrf.mxu0
        %v540 = vadd.f32 0.0, %v539
        %v541 = vpop.f32.mrf.mxu0
        %542 = vmatprep.mubr.f32.mxu0 0.0
        %543 = vmatmul.mubr.f32.gmra.mxu0 %v319
        %v544 = vpop.f32.mrf.mxu0
        %v545 = vadd.f32 0.0, %v544
        %v546 = vpop.f32.mrf.mxu0
        %547 = vmatprep.mubr.f32.mxu0 0.0
        %548 = vmatmul.mubr.f32.gmra.mxu0 %v322
        %v549 = vpop.f32.mrf.mxu0
        %v550 = vadd.f32 0.0, %v549
        %v551 = vpop.f32.mrf.mxu0
        %552 = vdwg.mxu0
        %v553 = vadd.f32 %v190, %v395
        %v554 = vadd.f32 %v190, %v400
        %v555 = vadd.f32 %v190, %v405
        %v556 = vadd.f32 %v190, %v410
        %v557 = vadd.f32 %v190, %v415
        %v558 = vadd.f32 %v190, %v420
        %v559 = vadd.f32 %v190, %v425
        %v560 = vadd.f32 %v190, %v430
        %v561 = vadd.f32 %v190, %v435
        %v562 = vadd.f32 %v190, %v440
        %v563 = vadd.f32 %v190, %v445
        %v564 = vadd.f32 %v190, %v450
        %v565 = vadd.f32 %v190, %v455
        %v566 = vadd.f32 %v190, %v460
        %v567 = vadd.f32 %v190, %v465
        %v568 = vadd.f32 %v190, %v470
        %v569 = vadd.f32 %v190, %v475
        %v570 = vadd.f32 %v190, %v480
        %v571 = vadd.f32 %v190, %v485
        %v572 = vadd.f32 %v190, %v490
        %v573 = vadd.f32 %v190, %v495
        %v574 = vadd.f32 %v190, %v500
        %v575 = vadd.f32 %v190, %v505
        %v576 = vadd.f32 %v190, %v510
        %v577 = vadd.f32 %v190, %v515
        %v578 = vadd.f32 %v190, %v520
        %v579 = vadd.f32 %v190, %v525
        %v580 = vadd.f32 %v190, %v530
        %v581 = vadd.f32 %v190, %v535
        %v582 = vadd.f32 %v190, %v540
        %v583 = vadd.f32 %v190, %v545
        %v584 = vadd.f32 %v190, %v550
        %v585 = vld [vmem:[%s193 + $0x1] sm:$0xff]
        %v586 = vld [vmem:[%s193 + $0x9] sm:$0xff]
        %v587 = vld [vmem:[%s193 + $0x19] sm:$0xff]
        %v588 = vld [vmem:[%s193 + $0x21] sm:$0xff]
        %v589 = vld [vmem:[%s193 + $0x31] sm:$0xff]
        %v590 = vld [vmem:[%s193 + $0x39] sm:$0xff]
        %v591 = vld [vmem:[%s193 + $0x49] sm:$0xff]
        %v592 = vld [vmem:[%s193 + $0x51] sm:$0xff]
        %v593 = vld [vmem:[%s193 + $0x61] sm:$0xff]
        %v594 = vld [vmem:[%s193 + $0x69] sm:$0xff]
        %v595 = vld [vmem:[%s193 + $0x79] sm:$0xff]
        %v596 = vld [vmem:[%s193 + $0x81] sm:$0xff]
        %v597 = vld [vmem:[%s193 + $0x91] sm:$0xff]
        %v598 = vld [vmem:[%s193 + $0x99] sm:$0xff]
        %v599 = vld [vmem:[%s193 + $0xa9] sm:$0xff]
        %v600 = vld [vmem:[%s193 + $0xb1] sm:$0xff]
        %v601 = vld [vmem:[%s193 + $0xc1] sm:$0xff]
        %v602 = vld [vmem:[%s193 + $0xc9] sm:$0xff]
        %v603 = vld [vmem:[%s193 + $0xd9] sm:$0xff]
        %v604 = vld [vmem:[%s193 + $0xe1] sm:$0xff]
        %v605 = vld [vmem:[%s193 + $0xf1] sm:$0xff]
        %v606 = vld [vmem:[%s193 + $0xf9] sm:$0xff]
        %v607 = vld [vmem:[%s193 + $0x109] sm:$0xff]
        %v608 = vld [vmem:[%s193 + $0x111] sm:$0xff]
        %v609 = vld [vmem:[%s193 + $0x121] sm:$0xff]
        %v610 = vld [vmem:[%s193 + $0x129] sm:$0xff]
        %v611 = vld [vmem:[%s193 + $0x139] sm:$0xff]
        %v612 = vld [vmem:[%s193 + $0x141] sm:$0xff]
        %v613 = vld [vmem:[%s193 + $0x151] sm:$0xff]
        %v614 = vld [vmem:[%s193 + $0x159] sm:$0xff]
        %v615 = vld [vmem:[%s193 + $0x169] sm:$0xff]
        %v616 = vld [vmem:[%s193 + $0x171] sm:$0xff]
        %s617 = scalar_lea.vmem %s1, 4
        %v618 = vld [vmem:[%s617] sm:$0xf]
        %v620 = vsel %vm227, %v585, 0
        %v623 = vsel %vm227, %v586, 0
        %v626 = vsel %vm227, %v587, 0
        %v629 = vsel %vm227, %v588, 0
        %v632 = vsel %vm227, %v589, 0
        %v635 = vsel %vm227, %v590, 0
        %v638 = vsel %vm227, %v591, 0
        %v641 = vsel %vm227, %v592, 0
        %v644 = vsel %vm227, %v593, 0
        %v647 = vsel %vm227, %v594, 0
        %v650 = vsel %vm227, %v595, 0
        %v653 = vsel %vm227, %v596, 0
        %v656 = vsel %vm227, %v597, 0
        %v659 = vsel %vm227, %v598, 0
        %v662 = vsel %vm227, %v599, 0
        %v665 = vsel %vm227, %v600, 0
        %v668 = vsel %vm227, %v601, 0
        %v671 = vsel %vm227, %v602, 0
        %v674 = vsel %vm227, %v603, 0
        %v677 = vsel %vm227, %v604, 0
        %v680 = vsel %vm227, %v605, 0
        %v683 = vsel %vm227, %v606, 0
        %v686 = vsel %vm227, %v607, 0
        %v689 = vsel %vm227, %v608, 0
        %v692 = vsel %vm227, %v609, 0
        %v695 = vsel %vm227, %v610, 0
        %v698 = vsel %vm227, %v611, 0
        %v701 = vsel %vm227, %v612, 0
        %v704 = vsel %vm227, %v613, 0
        %v707 = vsel %vm227, %v614, 0
        %v710 = vsel %vm227, %v615, 0
        %v713 = vsel %vm227, %v616, 0
        %v716 = vsel %vm324, %v618, 0
        %718 = vmatprep.subr.mxu0 0.0
        %719 = vmatpush1.msra.mxu0 0.0
        %720 = vmatprep.subr.mxu0 0.0
        %721 = vmatpush1.msra.mxu0 0.0
        %722 = vmatprep.subr.mxu0 0.0
        %723 = vmatpush1.msra.mxu0 0.0
        %724 = vmatprep.subr.mxu0 0.0
        %725 = vmatpush1.msra.mxu0 0.0
        %726 = vmatprep.subr.mxu0 0.0
        %727 = vmatpush1.msra.mxu0 0.0
        %728 = vmatprep.subr.mxu0 0.0
        %729 = vmatpush1.msra.mxu0 0.0
        %730 = vmatprep.subr.mxu0 0.0
        %731 = vmatpush1.msra.mxu0 0.0
        %732 = vmatprep.subr.mxu0 0.0
        %733 = vmatpush1.msra.mxu0 0.0
        %734 = vmatprep.subr.mxu0 0.0
        %735 = vmatpush1.msra.mxu0 0.0
        %736 = vmatprep.subr.mxu0 0.0
        %737 = vmatpush1.msra.mxu0 0.0
        %738 = vmatprep.subr.mxu0 0.0
        %739 = vmatpush1.msra.mxu0 0.0
        %740 = vmatprep.subr.mxu0 0.0
        %741 = vmatpush1.msra.mxu0 0.0
        %742 = vmatprep.subr.mxu0 0.0
        %743 = vmatpush1.msra.mxu0 0.0
        %744 = vmatprep.subr.mxu0 0.0
        %745 = vmatpush1.msra.mxu0 0.0
        %746 = vmatprep.subr.mxu0 0.0
        %747 = vmatpush1.msra.mxu0 0.0
        %748 = vmatprep.subr.mxu0 0.0
        %749 = vmatpush1.msra.mxu0 %v716
        %750 = vmatprep.subr.mxu0 0.0
        %751 = vmatpush2.msra.mxu0 0.0
        %752 = vmatprep.subr.mxu0 0.0
        %753 = vmatpush2.msra.mxu0 0.0
        %754 = vmatprep.subr.mxu0 0.0
        %755 = vmatpush2.msra.mxu0 0.0
        %756 = vmatprep.subr.mxu0 0.0
        %757 = vmatpush2.msra.mxu0 0.0
        %758 = vmatprep.subr.mxu0 0.0
        %759 = vmatpush2.msra.mxu0 0.0
        %760 = vmatprep.subr.mxu0 0.0
        %761 = vmatpush2.msra.mxu0 0.0
        %762 = vmatprep.subr.mxu0 0.0
        %763 = vmatpush2.msra.mxu0 0.0
        %764 = vmatprep.subr.mxu0 0.0
        %765 = vmatpush2.msra.mxu0 0.0
        %766 = vmatprep.subr.mxu0 0.0
        %767 = vmatpush2.msra.mxu0 0.0
        %768 = vmatprep.subr.mxu0 0.0
        %769 = vmatpush2.msra.mxu0 0.0
        %770 = vmatprep.subr.mxu0 0.0
        %771 = vmatpush2.msra.mxu0 0.0
        %772 = vmatprep.subr.mxu0 0.0
        %773 = vmatpush2.msra.mxu0 0.0
        %774 = vmatprep.subr.mxu0 0.0
        %775 = vmatpush2.msra.mxu0 0.0
        %776 = vmatprep.subr.mxu0 0.0
        %777 = vmatpush2.msra.mxu0 0.0
        %778 = vmatprep.subr.mxu0 0.0
        %779 = vmatpush2.msra.mxu0 0.0
        %780 = vmatprep.subr.mxu0 0.0
        %781 = vmatpush2.msra.mxu0 0.0
        %782 = vmatprep.mubr.f32.mxu0 0.0
        %783 = vmatmul.mubr.f32.gmra.mxu0 %v620
        %v784 = vpop.f32.mrf.mxu0
        %v785 = vadd.f32 0.0, %v784
        %v786 = vpop.f32.mrf.mxu0
        %787 = vmatprep.mubr.f32.mxu0 0.0
        %788 = vmatmul.mubr.f32.gmra.mxu0 %v623
        %v789 = vpop.f32.mrf.mxu0
        %v790 = vadd.f32 0.0, %v789
        %v791 = vpop.f32.mrf.mxu0
        %792 = vmatprep.mubr.f32.mxu0 0.0
        %793 = vmatmul.mubr.f32.gmra.mxu0 %v626
        %v794 = vpop.f32.mrf.mxu0
        %v795 = vadd.f32 0.0, %v794
        %v796 = vpop.f32.mrf.mxu0
        %797 = vmatprep.mubr.f32.mxu0 0.0
        %798 = vmatmul.mubr.f32.gmra.mxu0 %v629
        %v799 = vpop.f32.mrf.mxu0
        %v800 = vadd.f32 0.0, %v799
        %v801 = vpop.f32.mrf.mxu0
        %802 = vmatprep.mubr.f32.mxu0 0.0
        %803 = vmatmul.mubr.f32.gmra.mxu0 %v632
        %v804 = vpop.f32.mrf.mxu0
        %v805 = vadd.f32 0.0, %v804
        %v806 = vpop.f32.mrf.mxu0
        %807 = vmatprep.mubr.f32.mxu0 0.0
        %808 = vmatmul.mubr.f32.gmra.mxu0 %v635
        %v809 = vpop.f32.mrf.mxu0
        %v810 = vadd.f32 0.0, %v809
        %v811 = vpop.f32.mrf.mxu0
        %812 = vmatprep.mubr.f32.mxu0 0.0
        %813 = vmatmul.mubr.f32.gmra.mxu0 %v638
        %v814 = vpop.f32.mrf.mxu0
        %v815 = vadd.f32 0.0, %v814
        %v816 = vpop.f32.mrf.mxu0
        %817 = vmatprep.mubr.f32.mxu0 0.0
        %818 = vmatmul.mubr.f32.gmra.mxu0 %v641
        %v819 = vpop.f32.mrf.mxu0
        %v820 = vadd.f32 0.0, %v819
        %v821 = vpop.f32.mrf.mxu0
        %822 = vmatprep.mubr.f32.mxu0 0.0
        %823 = vmatmul.mubr.f32.gmra.mxu0 %v644
        %v824 = vpop.f32.mrf.mxu0
        %v825 = vadd.f32 0.0, %v824
        %v826 = vpop.f32.mrf.mxu0
        %827 = vmatprep.mubr.f32.mxu0 0.0
        %828 = vmatmul.mubr.f32.gmra.mxu0 %v647
        %v829 = vpop.f32.mrf.mxu0
        %v830 = vadd.f32 0.0, %v829
        %v831 = vpop.f32.mrf.mxu0
        %832 = vmatprep.mubr.f32.mxu0 0.0
        %833 = vmatmul.mubr.f32.gmra.mxu0 %v650
        %v834 = vpop.f32.mrf.mxu0
        %v835 = vadd.f32 0.0, %v834
        %v836 = vpop.f32.mrf.mxu0
        %837 = vmatprep.mubr.f32.mxu0 0.0
        %838 = vmatmul.mubr.f32.gmra.mxu0 %v653
        %v839 = vpop.f32.mrf.mxu0
        %v840 = vadd.f32 0.0, %v839
        %v841 = vpop.f32.mrf.mxu0
        %842 = vmatprep.mubr.f32.mxu0 0.0
        %843 = vmatmul.mubr.f32.gmra.mxu0 %v656
        %v844 = vpop.f32.mrf.mxu0
        %v845 = vadd.f32 0.0, %v844
        %v846 = vpop.f32.mrf.mxu0
        %847 = vmatprep.mubr.f32.mxu0 0.0
        %848 = vmatmul.mubr.f32.gmra.mxu0 %v659
        %v849 = vpop.f32.mrf.mxu0
        %v850 = vadd.f32 0.0, %v849
        %v851 = vpop.f32.mrf.mxu0
        %852 = vmatprep.mubr.f32.mxu0 0.0
        %853 = vmatmul.mubr.f32.gmra.mxu0 %v662
        %v854 = vpop.f32.mrf.mxu0
        %v855 = vadd.f32 0.0, %v854
        %v856 = vpop.f32.mrf.mxu0
        %857 = vmatprep.mubr.f32.mxu0 0.0
        %858 = vmatmul.mubr.f32.gmra.mxu0 %v665
        %v859 = vpop.f32.mrf.mxu0
        %v860 = vadd.f32 0.0, %v859
        %v861 = vpop.f32.mrf.mxu0
        %862 = vmatprep.mubr.f32.mxu0 0.0
        %863 = vmatmul.mubr.f32.gmra.mxu0 %v668
        %v864 = vpop.f32.mrf.mxu0
        %v865 = vadd.f32 0.0, %v864
        %v866 = vpop.f32.mrf.mxu0
        %867 = vmatprep.mubr.f32.mxu0 0.0
        %868 = vmatmul.mubr.f32.gmra.mxu0 %v671
        %v869 = vpop.f32.mrf.mxu0
        %v870 = vadd.f32 0.0, %v869
        %v871 = vpop.f32.mrf.mxu0
        %872 = vmatprep.mubr.f32.mxu0 0.0
        %873 = vmatmul.mubr.f32.gmra.mxu0 %v674
        %v874 = vpop.f32.mrf.mxu0
        %v875 = vadd.f32 0.0, %v874
        %v876 = vpop.f32.mrf.mxu0
        %877 = vmatprep.mubr.f32.mxu0 0.0
        %878 = vmatmul.mubr.f32.gmra.mxu0 %v677
        %v879 = vpop.f32.mrf.mxu0
        %v880 = vadd.f32 0.0, %v879
        %v881 = vpop.f32.mrf.mxu0
        %882 = vmatprep.mubr.f32.mxu0 0.0
        %883 = vmatmul.mubr.f32.gmra.mxu0 %v680
        %v884 = vpop.f32.mrf.mxu0
        %v885 = vadd.f32 0.0, %v884
        %v886 = vpop.f32.mrf.mxu0
        %887 = vmatprep.mubr.f32.mxu0 0.0
        %888 = vmatmul.mubr.f32.gmra.mxu0 %v683
        %v889 = vpop.f32.mrf.mxu0
        %v890 = vadd.f32 0.0, %v889
        %v891 = vpop.f32.mrf.mxu0
        %892 = vmatprep.mubr.f32.mxu0 0.0
        %893 = vmatmul.mubr.f32.gmra.mxu0 %v686
        %v894 = vpop.f32.mrf.mxu0
        %v895 = vadd.f32 0.0, %v894
        %v896 = vpop.f32.mrf.mxu0
        %897 = vmatprep.mubr.f32.mxu0 0.0
        %898 = vmatmul.mubr.f32.gmra.mxu0 %v689
        %v899 = vpop.f32.mrf.mxu0
        %v900 = vadd.f32 0.0, %v899
        %v901 = vpop.f32.mrf.mxu0
        %902 = vmatprep.mubr.f32.mxu0 0.0
        %903 = vmatmul.mubr.f32.gmra.mxu0 %v692
        %v904 = vpop.f32.mrf.mxu0
        %v905 = vadd.f32 0.0, %v904
        %v906 = vpop.f32.mrf.mxu0
        %907 = vmatprep.mubr.f32.mxu0 0.0
        %908 = vmatmul.mubr.f32.gmra.mxu0 %v695
        %v909 = vpop.f32.mrf.mxu0
        %v910 = vadd.f32 0.0, %v909
        %v911 = vpop.f32.mrf.mxu0
        %912 = vmatprep.mubr.f32.mxu0 0.0
        %913 = vmatmul.mubr.f32.gmra.mxu0 %v698
        %v914 = vpop.f32.mrf.mxu0
        %v915 = vadd.f32 0.0, %v914
        %v916 = vpop.f32.mrf.mxu0
        %917 = vmatprep.mubr.f32.mxu0 0.0
        %918 = vmatmul.mubr.f32.gmra.mxu0 %v701
        %v919 = vpop.f32.mrf.mxu0
        %v920 = vadd.f32 0.0, %v919
        %v921 = vpop.f32.mrf.mxu0
        %922 = vmatprep.mubr.f32.mxu0 0.0
        %923 = vmatmul.mubr.f32.gmra.mxu0 %v704
        %v924 = vpop.f32.mrf.mxu0
        %v925 = vadd.f32 0.0, %v924
        %v926 = vpop.f32.mrf.mxu0
        %927 = vmatprep.mubr.f32.mxu0 0.0
        %928 = vmatmul.mubr.f32.gmra.mxu0 %v707
        %v929 = vpop.f32.mrf.mxu0
        %v930 = vadd.f32 0.0, %v929
        %v931 = vpop.f32.mrf.mxu0
        %932 = vmatprep.mubr.f32.mxu0 0.0
        %933 = vmatmul.mubr.f32.gmra.mxu0 %v710
        %v934 = vpop.f32.mrf.mxu0
        %v935 = vadd.f32 0.0, %v934
        %v936 = vpop.f32.mrf.mxu0
        %937 = vmatprep.mubr.f32.mxu0 0.0
        %938 = vmatmul.mubr.f32.gmra.mxu0 %v713
        %v939 = vpop.f32.mrf.mxu0
        %v940 = vadd.f32 0.0, %v939
        %v941 = vpop.f32.mrf.mxu0
        %942 = vdwg.mxu0
        %v943 = vadd.f32 %v553, %v785
        %v944 = vadd.f32 %v554, %v790
        %v945 = vadd.f32 %v555, %v795
        %v946 = vadd.f32 %v556, %v800
        %v947 = vadd.f32 %v557, %v805
        %v948 = vadd.f32 %v558, %v810
        %v949 = vadd.f32 %v559, %v815
        %v950 = vadd.f32 %v560, %v820
        %v951 = vadd.f32 %v561, %v825
        %v952 = vadd.f32 %v562, %v830
        %v953 = vadd.f32 %v563, %v835
        %v954 = vadd.f32 %v564, %v840
        %v955 = vadd.f32 %v565, %v845
        %v956 = vadd.f32 %v566, %v850
        %v957 = vadd.f32 %v567, %v855
        %v958 = vadd.f32 %v568, %v860
        %v959 = vadd.f32 %v569, %v865
        %v960 = vadd.f32 %v570, %v870
        %v961 = vadd.f32 %v571, %v875
        %v962 = vadd.f32 %v572, %v880
        %v963 = vadd.f32 %v573, %v885
        %v964 = vadd.f32 %v574, %v890
        %v965 = vadd.f32 %v575, %v895
        %v966 = vadd.f32 %v576, %v900
        %v967 = vadd.f32 %v577, %v905
        %v968 = vadd.f32 %v578, %v910
        %v969 = vadd.f32 %v579, %v915
        %v970 = vadd.f32 %v580, %v920
        %v971 = vadd.f32 %v581, %v925
        %v972 = vadd.f32 %v582, %v930
        %v973 = vadd.f32 %v583, %v935
        %v974 = vadd.f32 %v584, %v940
        %s975 = sadd.s32 %s184, 1
        %s976 = smul.u32 %s975, 24
        %s977 = scalar_lea.vmem %s182, %s976
        %v978 = vld [vmem:[%s977] sm:$0xff]
        %v979 = vld [vmem:[%s977 + $0x8] sm:$0xff]
        %v980 = vld [vmem:[%s977 + $0x18] sm:$0xff]
        %v981 = vld [vmem:[%s977 + $0x20] sm:$0xff]
        %v982 = vld [vmem:[%s977 + $0x30] sm:$0xff]
        %v983 = vld [vmem:[%s977 + $0x38] sm:$0xff]
        %v984 = vld [vmem:[%s977 + $0x48] sm:$0xff]
        %v985 = vld [vmem:[%s977 + $0x50] sm:$0xff]
        %v986 = vld [vmem:[%s977 + $0x60] sm:$0xff]
        %v987 = vld [vmem:[%s977 + $0x68] sm:$0xff]
        %v988 = vld [vmem:[%s977 + $0x78] sm:$0xff]
        %v989 = vld [vmem:[%s977 + $0x80] sm:$0xff]
        %v990 = vld [vmem:[%s977 + $0x90] sm:$0xff]
        %v991 = vld [vmem:[%s977 + $0x98] sm:$0xff]
        %v992 = vld [vmem:[%s977 + $0xa8] sm:$0xff]
        %v993 = vld [vmem:[%s977 + $0xb0] sm:$0xff]
        %v994 = vld [vmem:[%s977 + $0xc0] sm:$0xff]
        %v995 = vld [vmem:[%s977 + $0xc8] sm:$0xff]
        %v996 = vld [vmem:[%s977 + $0xd8] sm:$0xff]
        %v997 = vld [vmem:[%s977 + $0xe0] sm:$0xff]
        %v998 = vld [vmem:[%s977 + $0xf0] sm:$0xff]
        %v999 = vld [vmem:[%s977 + $0xf8] sm:$0xff]
        %v1000 = vld [vmem:[%s977 + $0x108] sm:$0xff]
        %v1001 = vld [vmem:[%s977 + $0x110] sm:$0xff]
        %v1002 = vld [vmem:[%s977 + $0x120] sm:$0xff]
        %v1003 = vld [vmem:[%s977 + $0x128] sm:$0xff]
        %v1004 = vld [vmem:[%s977 + $0x138] sm:$0xff]
        %v1005 = vld [vmem:[%s977 + $0x140] sm:$0xff]
        %v1006 = vld [vmem:[%s977 + $0x150] sm:$0xff]
        %v1007 = vld [vmem:[%s977 + $0x158] sm:$0xff]
        %v1008 = vld [vmem:[%s977 + $0x168] sm:$0xff]
        %v1009 = vld [vmem:[%s977 + $0x170] sm:$0xff]
        %s1010 = scalar_lea.vmem %s1, 8
        %v1011 = vld [vmem:[%s1010] sm:$0xf]
        %v1013 = vsel %vm227, %v978, 0
        %v1016 = vsel %vm227, %v979, 0
        %v1019 = vsel %vm227, %v980, 0
        %v1022 = vsel %vm227, %v981, 0
        %v1025 = vsel %vm227, %v982, 0
        %v1028 = vsel %vm227, %v983, 0
        %v1031 = vsel %vm227, %v984, 0
        %v1034 = vsel %vm227, %v985, 0
        %v1037 = vsel %vm227, %v986, 0
        %v1040 = vsel %vm227, %v987, 0
        %v1043 = vsel %vm227, %v988, 0
        %v1046 = vsel %vm227, %v989, 0
        %v1049 = vsel %vm227, %v990, 0
        %v1052 = vsel %vm227, %v991, 0
        %v1055 = vsel %vm227, %v992, 0
        %v1058 = vsel %vm227, %v993, 0
        %v1061 = vsel %vm227, %v994, 0
        %v1064 = vsel %vm227, %v995, 0
        %v1067 = vsel %vm227, %v996, 0
        %v1070 = vsel %vm227, %v997, 0
        %v1073 = vsel %vm227, %v998, 0
        %v1076 = vsel %vm227, %v999, 0
        %v1079 = vsel %vm227, %v1000, 0
        %v1082 = vsel %vm227, %v1001, 0
        %v1085 = vsel %vm227, %v1002, 0
        %v1088 = vsel %vm227, %v1003, 0
        %v1091 = vsel %vm227, %v1004, 0
        %v1094 = vsel %vm227, %v1005, 0
        %v1097 = vsel %vm227, %v1006, 0
        %v1100 = vsel %vm227, %v1007, 0
        %v1103 = vsel %vm227, %v1008, 0
        %v1106 = vsel %vm227, %v1009, 0
        %v1109 = vsel %vm324, %v1011, 0
        %1111 = vmatprep.subr.mxu0 0.0
        %1112 = vmatpush1.msra.mxu0 0.0
        %1113 = vmatprep.subr.mxu0 0.0
        %1114 = vmatpush1.msra.mxu0 0.0
        %1115 = vmatprep.subr.mxu0 0.0
        %1116 = vmatpush1.msra.mxu0 0.0
        %1117 = vmatprep.subr.mxu0 0.0
        %1118 = vmatpush1.msra.mxu0 0.0
        %1119 = vmatprep.subr.mxu0 0.0
        %1120 = vmatpush1.msra.mxu0 0.0
        %1121 = vmatprep.subr.mxu0 0.0
        %1122 = vmatpush1.msra.mxu0 0.0
        %1123 = vmatprep.subr.mxu0 0.0
        %1124 = vmatpush1.msra.mxu0 0.0
        %1125 = vmatprep.subr.mxu0 0.0
        %1126 = vmatpush1.msra.mxu0 0.0
        %1127 = vmatprep.subr.mxu0 0.0
        %1128 = vmatpush1.msra.mxu0 0.0
        %1129 = vmatprep.subr.mxu0 0.0
        %1130 = vmatpush1.msra.mxu0 0.0
        %1131 = vmatprep.subr.mxu0 0.0
        %1132 = vmatpush1.msra.mxu0 0.0
        %1133 = vmatprep.subr.mxu0 0.0
        %1134 = vmatpush1.msra.mxu0 0.0
        %1135 = vmatprep.subr.mxu0 0.0
        %1136 = vmatpush1.msra.mxu0 0.0
        %1137 = vmatprep.subr.mxu0 0.0
        %1138 = vmatpush1.msra.mxu0 0.0
        %1139 = vmatprep.subr.mxu0 0.0
        %1140 = vmatpush1.msra.mxu0 0.0
        %1141 = vmatprep.subr.mxu0 0.0
        %1142 = vmatpush1.msra.mxu0 %v1109
        %1143 = vmatprep.subr.mxu0 0.0
        %1144 = vmatpush2.msra.mxu0 0.0
        %1145 = vmatprep.subr.mxu0 0.0
        %1146 = vmatpush2.msra.mxu0 0.0
        %1147 = vmatprep.subr.mxu0 0.0
        %1148 = vmatpush2.msra.mxu0 0.0
        %1149 = vmatprep.subr.mxu0 0.0
        %1150 = vmatpush2.msra.mxu0 0.0
        %1151 = vmatprep.subr.mxu0 0.0
        %1152 = vmatpush2.msra.mxu0 0.0
        %1153 = vmatprep.subr.mxu0 0.0
        %1154 = vmatpush2.msra.mxu0 0.0
        %1155 = vmatprep.subr.mxu0 0.0
        %1156 = vmatpush2.msra.mxu0 0.0
        %1157 = vmatprep.subr.mxu0 0.0
        %1158 = vmatpush2.msra.mxu0 0.0
        %1159 = vmatprep.subr.mxu0 0.0
        %1160 = vmatpush2.msra.mxu0 0.0
        %1161 = vmatprep.subr.mxu0 0.0
        %1162 = vmatpush2.msra.mxu0 0.0
        %1163 = vmatprep.subr.mxu0 0.0
        %1164 = vmatpush2.msra.mxu0 0.0
        %1165 = vmatprep.subr.mxu0 0.0
        %1166 = vmatpush2.msra.mxu0 0.0
        %1167 = vmatprep.subr.mxu0 0.0
        %1168 = vmatpush2.msra.mxu0 0.0
        %1169 = vmatprep.subr.mxu0 0.0
        %1170 = vmatpush2.msra.mxu0 0.0
        %1171 = vmatprep.subr.mxu0 0.0
        %1172 = vmatpush2.msra.mxu0 0.0
        %1173 = vmatprep.subr.mxu0 0.0
        %1174 = vmatpush2.msra.mxu0 0.0
        %1175 = vmatprep.mubr.f32.mxu0 0.0
        %1176 = vmatmul.mubr.f32.gmra.mxu0 %v1013
        %v1177 = vpop.f32.mrf.mxu0
        %v1178 = vadd.f32 0.0, %v1177
        %v1179 = vpop.f32.mrf.mxu0
        %1180 = vmatprep.mubr.f32.mxu0 0.0
        %1181 = vmatmul.mubr.f32.gmra.mxu0 %v1016
        %v1182 = vpop.f32.mrf.mxu0
        %v1183 = vadd.f32 0.0, %v1182
        %v1184 = vpop.f32.mrf.mxu0
        %1185 = vmatprep.mubr.f32.mxu0 0.0
        %1186 = vmatmul.mubr.f32.gmra.mxu0 %v1019
        %v1187 = vpop.f32.mrf.mxu0
        %v1188 = vadd.f32 0.0, %v1187
        %v1189 = vpop.f32.mrf.mxu0
        %1190 = vmatprep.mubr.f32.mxu0 0.0
        %1191 = vmatmul.mubr.f32.gmra.mxu0 %v1022
        %v1192 = vpop.f32.mrf.mxu0
        %v1193 = vadd.f32 0.0, %v1192
        %v1194 = vpop.f32.mrf.mxu0
        %1195 = vmatprep.mubr.f32.mxu0 0.0
        %1196 = vmatmul.mubr.f32.gmra.mxu0 %v1025
        %v1197 = vpop.f32.mrf.mxu0
        %v1198 = vadd.f32 0.0, %v1197
        %v1199 = vpop.f32.mrf.mxu0
        %1200 = vmatprep.mubr.f32.mxu0 0.0
        %1201 = vmatmul.mubr.f32.gmra.mxu0 %v1028
        %v1202 = vpop.f32.mrf.mxu0
        %v1203 = vadd.f32 0.0, %v1202
        %v1204 = vpop.f32.mrf.mxu0
        %1205 = vmatprep.mubr.f32.mxu0 0.0
        %1206 = vmatmul.mubr.f32.gmra.mxu0 %v1031
        %v1207 = vpop.f32.mrf.mxu0
        %v1208 = vadd.f32 0.0, %v1207
        %v1209 = vpop.f32.mrf.mxu0
        %1210 = vmatprep.mubr.f32.mxu0 0.0
        %1211 = vmatmul.mubr.f32.gmra.mxu0 %v1034
        %v1212 = vpop.f32.mrf.mxu0
        %v1213 = vadd.f32 0.0, %v1212
        %v1214 = vpop.f32.mrf.mxu0
        %1215 = vmatprep.mubr.f32.mxu0 0.0
        %1216 = vmatmul.mubr.f32.gmra.mxu0 %v1037
        %v1217 = vpop.f32.mrf.mxu0
        %v1218 = vadd.f32 0.0, %v1217
        %v1219 = vpop.f32.mrf.mxu0
        %1220 = vmatprep.mubr.f32.mxu0 0.0
        %1221 = vmatmul.mubr.f32.gmra.mxu0 %v1040
        %v1222 = vpop.f32.mrf.mxu0
        %v1223 = vadd.f32 0.0, %v1222
        %v1224 = vpop.f32.mrf.mxu0
        %1225 = vmatprep.mubr.f32.mxu0 0.0
        %1226 = vmatmul.mubr.f32.gmra.mxu0 %v1043
        %v1227 = vpop.f32.mrf.mxu0
        %v1228 = vadd.f32 0.0, %v1227
        %v1229 = vpop.f32.mrf.mxu0
        %1230 = vmatprep.mubr.f32.mxu0 0.0
        %1231 = vmatmul.mubr.f32.gmra.mxu0 %v1046
        %v1232 = vpop.f32.mrf.mxu0
        %v1233 = vadd.f32 0.0, %v1232
        %v1234 = vpop.f32.mrf.mxu0
        %1235 = vmatprep.mubr.f32.mxu0 0.0
        %1236 = vmatmul.mubr.f32.gmra.mxu0 %v1049
        %v1237 = vpop.f32.mrf.mxu0
        %v1238 = vadd.f32 0.0, %v1237
        %v1239 = vpop.f32.mrf.mxu0
        %1240 = vmatprep.mubr.f32.mxu0 0.0
        %1241 = vmatmul.mubr.f32.gmra.mxu0 %v1052
        %v1242 = vpop.f32.mrf.mxu0
        %v1243 = vadd.f32 0.0, %v1242
        %v1244 = vpop.f32.mrf.mxu0
        %1245 = vmatprep.mubr.f32.mxu0 0.0
        %1246 = vmatmul.mubr.f32.gmra.mxu0 %v1055
        %v1247 = vpop.f32.mrf.mxu0
        %v1248 = vadd.f32 0.0, %v1247
        %v1249 = vpop.f32.mrf.mxu0
        %1250 = vmatprep.mubr.f32.mxu0 0.0
        %1251 = vmatmul.mubr.f32.gmra.mxu0 %v1058
        %v1252 = vpop.f32.mrf.mxu0
        %v1253 = vadd.f32 0.0, %v1252
        %v1254 = vpop.f32.mrf.mxu0
        %1255 = vmatprep.mubr.f32.mxu0 0.0
        %1256 = vmatmul.mubr.f32.gmra.mxu0 %v1061
        %v1257 = vpop.f32.mrf.mxu0
        %v1258 = vadd.f32 0.0, %v1257
        %v1259 = vpop.f32.mrf.mxu0
        %1260 = vmatprep.mubr.f32.mxu0 0.0
        %1261 = vmatmul.mubr.f32.gmra.mxu0 %v1064
        %v1262 = vpop.f32.mrf.mxu0
        %v1263 = vadd.f32 0.0, %v1262
        %v1264 = vpop.f32.mrf.mxu0
        %1265 = vmatprep.mubr.f32.mxu0 0.0
        %1266 = vmatmul.mubr.f32.gmra.mxu0 %v1067
        %v1267 = vpop.f32.mrf.mxu0
        %v1268 = vadd.f32 0.0, %v1267
        %v1269 = vpop.f32.mrf.mxu0
        %1270 = vmatprep.mubr.f32.mxu0 0.0
        %1271 = vmatmul.mubr.f32.gmra.mxu0 %v1070
        %v1272 = vpop.f32.mrf.mxu0
        %v1273 = vadd.f32 0.0, %v1272
        %v1274 = vpop.f32.mrf.mxu0
        %1275 = vmatprep.mubr.f32.mxu0 0.0
        %1276 = vmatmul.mubr.f32.gmra.mxu0 %v1073
        %v1277 = vpop.f32.mrf.mxu0
        %v1278 = vadd.f32 0.0, %v1277
        %v1279 = vpop.f32.mrf.mxu0
        %1280 = vmatprep.mubr.f32.mxu0 0.0
        %1281 = vmatmul.mubr.f32.gmra.mxu0 %v1076
        %v1282 = vpop.f32.mrf.mxu0
        %v1283 = vadd.f32 0.0, %v1282
        %v1284 = vpop.f32.mrf.mxu0
        %1285 = vmatprep.mubr.f32.mxu0 0.0
        %1286 = vmatmul.mubr.f32.gmra.mxu0 %v1079
        %v1287 = vpop.f32.mrf.mxu0
        %v1288 = vadd.f32 0.0, %v1287
        %v1289 = vpop.f32.mrf.mxu0
        %1290 = vmatprep.mubr.f32.mxu0 0.0
        %1291 = vmatmul.mubr.f32.gmra.mxu0 %v1082
        %v1292 = vpop.f32.mrf.mxu0
        %v1293 = vadd.f32 0.0, %v1292
        %v1294 = vpop.f32.mrf.mxu0
        %1295 = vmatprep.mubr.f32.mxu0 0.0
        %1296 = vmatmul.mubr.f32.gmra.mxu0 %v1085
        %v1297 = vpop.f32.mrf.mxu0
        %v1298 = vadd.f32 0.0, %v1297
        %v1299 = vpop.f32.mrf.mxu0
        %1300 = vmatprep.mubr.f32.mxu0 0.0
        %1301 = vmatmul.mubr.f32.gmra.mxu0 %v1088
        %v1302 = vpop.f32.mrf.mxu0
        %v1303 = vadd.f32 0.0, %v1302
        %v1304 = vpop.f32.mrf.mxu0
        %1305 = vmatprep.mubr.f32.mxu0 0.0
        %1306 = vmatmul.mubr.f32.gmra.mxu0 %v1091
        %v1307 = vpop.f32.mrf.mxu0
        %v1308 = vadd.f32 0.0, %v1307
        %v1309 = vpop.f32.mrf.mxu0
        %1310 = vmatprep.mubr.f32.mxu0 0.0
        %1311 = vmatmul.mubr.f32.gmra.mxu0 %v1094
        %v1312 = vpop.f32.mrf.mxu0
        %v1313 = vadd.f32 0.0, %v1312
        %v1314 = vpop.f32.mrf.mxu0
        %1315 = vmatprep.mubr.f32.mxu0 0.0
        %1316 = vmatmul.mubr.f32.gmra.mxu0 %v1097
        %v1317 = vpop.f32.mrf.mxu0
        %v1318 = vadd.f32 0.0, %v1317
        %v1319 = vpop.f32.mrf.mxu0
        %1320 = vmatprep.mubr.f32.mxu0 0.0
        %1321 = vmatmul.mubr.f32.gmra.mxu0 %v1100
        %v1322 = vpop.f32.mrf.mxu0
        %v1323 = vadd.f32 0.0, %v1322
        %v1324 = vpop.f32.mrf.mxu0
        %1325 = vmatprep.mubr.f32.mxu0 0.0
        %1326 = vmatmul.mubr.f32.gmra.mxu0 %v1103
        %v1327 = vpop.f32.mrf.mxu0
        %v1328 = vadd.f32 0.0, %v1327
        %v1329 = vpop.f32.mrf.mxu0
        %1330 = vmatprep.mubr.f32.mxu0 0.0
        %1331 = vmatmul.mubr.f32.gmra.mxu0 %v1106
        %v1332 = vpop.f32.mrf.mxu0
        %v1333 = vadd.f32 0.0, %v1332
        %v1334 = vpop.f32.mrf.mxu0
        %1335 = vdwg.mxu0
        %v1336 = vadd.f32 %v943, %v1178
        %v1337 = vadd.f32 %v944, %v1183
        %v1338 = vadd.f32 %v945, %v1188
        %v1339 = vadd.f32 %v946, %v1193
        %v1340 = vadd.f32 %v947, %v1198
        %v1341 = vadd.f32 %v948, %v1203
        %v1342 = vadd.f32 %v949, %v1208
        %v1343 = vadd.f32 %v950, %v1213
        %v1344 = vadd.f32 %v951, %v1218
        %v1345 = vadd.f32 %v952, %v1223
        %v1346 = vadd.f32 %v953, %v1228
        %v1347 = vadd.f32 %v954, %v1233
        %v1348 = vadd.f32 %v955, %v1238
        %v1349 = vadd.f32 %v956, %v1243
        %v1350 = vadd.f32 %v957, %v1248
        %v1351 = vadd.f32 %v958, %v1253
        %v1352 = vadd.f32 %v959, %v1258
        %v1353 = vadd.f32 %v960, %v1263
        %v1354 = vadd.f32 %v961, %v1268
        %v1355 = vadd.f32 %v962, %v1273
        %v1356 = vadd.f32 %v963, %v1278
        %v1357 = vadd.f32 %v964, %v1283
        %v1358 = vadd.f32 %v965, %v1288
        %v1359 = vadd.f32 %v966, %v1293
        %v1360 = vadd.f32 %v967, %v1298
        %v1361 = vadd.f32 %v968, %v1303
        %v1362 = vadd.f32 %v969, %v1308
        %v1363 = vadd.f32 %v970, %v1313
        %v1364 = vadd.f32 %v971, %v1318
        %v1365 = vadd.f32 %v972, %v1323
        %v1366 = vadd.f32 %v973, %v1328
        %v1367 = vadd.f32 %v974, %v1333
        %v1368 = vld [vmem:[%s977 + $0x1] sm:$0xff]
        %v1369 = vld [vmem:[%s977 + $0x9] sm:$0xff]
        %v1370 = vld [vmem:[%s977 + $0x19] sm:$0xff]
        %v1371 = vld [vmem:[%s977 + $0x21] sm:$0xff]
        %v1372 = vld [vmem:[%s977 + $0x31] sm:$0xff]
        %v1373 = vld [vmem:[%s977 + $0x39] sm:$0xff]
        %v1374 = vld [vmem:[%s977 + $0x49] sm:$0xff]
        %v1375 = vld [vmem:[%s977 + $0x51] sm:$0xff]
        %v1376 = vld [vmem:[%s977 + $0x61] sm:$0xff]
        %v1377 = vld [vmem:[%s977 + $0x69] sm:$0xff]
        %v1378 = vld [vmem:[%s977 + $0x79] sm:$0xff]
        %v1379 = vld [vmem:[%s977 + $0x81] sm:$0xff]
        %v1380 = vld [vmem:[%s977 + $0x91] sm:$0xff]
        %v1381 = vld [vmem:[%s977 + $0x99] sm:$0xff]
        %v1382 = vld [vmem:[%s977 + $0xa9] sm:$0xff]
        %v1383 = vld [vmem:[%s977 + $0xb1] sm:$0xff]
        %v1384 = vld [vmem:[%s977 + $0xc1] sm:$0xff]
        %v1385 = vld [vmem:[%s977 + $0xc9] sm:$0xff]
        %v1386 = vld [vmem:[%s977 + $0xd9] sm:$0xff]
        %v1387 = vld [vmem:[%s977 + $0xe1] sm:$0xff]
        %v1388 = vld [vmem:[%s977 + $0xf1] sm:$0xff]
        %v1389 = vld [vmem:[%s977 + $0xf9] sm:$0xff]
        %v1390 = vld [vmem:[%s977 + $0x109] sm:$0xff]
        %v1391 = vld [vmem:[%s977 + $0x111] sm:$0xff]
        %v1392 = vld [vmem:[%s977 + $0x121] sm:$0xff]
        %v1393 = vld [vmem:[%s977 + $0x129] sm:$0xff]
        %v1394 = vld [vmem:[%s977 + $0x139] sm:$0xff]
        %v1395 = vld [vmem:[%s977 + $0x141] sm:$0xff]
        %v1396 = vld [vmem:[%s977 + $0x151] sm:$0xff]
        %v1397 = vld [vmem:[%s977 + $0x159] sm:$0xff]
        %v1398 = vld [vmem:[%s977 + $0x169] sm:$0xff]
        %v1399 = vld [vmem:[%s977 + $0x171] sm:$0xff]
        %s1400 = scalar_lea.vmem %s1, 12
        %v1401 = vld [vmem:[%s1400] sm:$0xf]
        %v1403 = vsel %vm227, %v1368, 0
        %v1406 = vsel %vm227, %v1369, 0
        %v1409 = vsel %vm227, %v1370, 0
        %v1412 = vsel %vm227, %v1371, 0
        %v1415 = vsel %vm227, %v1372, 0
        %v1418 = vsel %vm227, %v1373, 0
        %v1421 = vsel %vm227, %v1374, 0
        %v1424 = vsel %vm227, %v1375, 0
        %v1427 = vsel %vm227, %v1376, 0
        %v1430 = vsel %vm227, %v1377, 0
        %v1433 = vsel %vm227, %v1378, 0
        %v1436 = vsel %vm227, %v1379, 0
        %v1439 = vsel %vm227, %v1380, 0
        %v1442 = vsel %vm227, %v1381, 0
        %v1445 = vsel %vm227, %v1382, 0
        %v1448 = vsel %vm227, %v1383, 0
        %v1451 = vsel %vm227, %v1384, 0
        %v1454 = vsel %vm227, %v1385, 0
        %v1457 = vsel %vm227, %v1386, 0
        %v1460 = vsel %vm227, %v1387, 0
        %v1463 = vsel %vm227, %v1388, 0
        %v1466 = vsel %vm227, %v1389, 0
        %v1469 = vsel %vm227, %v1390, 0
        %v1472 = vsel %vm227, %v1391, 0
        %v1475 = vsel %vm227, %v1392, 0
        %v1478 = vsel %vm227, %v1393, 0
        %v1481 = vsel %vm227, %v1394, 0
        %v1484 = vsel %vm227, %v1395, 0
        %v1487 = vsel %vm227, %v1396, 0
        %v1490 = vsel %vm227, %v1397, 0
        %v1493 = vsel %vm227, %v1398, 0
        %v1496 = vsel %vm227, %v1399, 0
        %v1499 = vsel %vm324, %v1401, 0
        %1501 = vmatprep.subr.mxu0 0.0
        %1502 = vmatpush1.msra.mxu0 0.0
        %1503 = vmatprep.subr.mxu0 0.0
        %1504 = vmatpush1.msra.mxu0 0.0
        %1505 = vmatprep.subr.mxu0 0.0
        %1506 = vmatpush1.msra.mxu0 0.0
        %1507 = vmatprep.subr.mxu0 0.0
        %1508 = vmatpush1.msra.mxu0 0.0
        %1509 = vmatprep.subr.mxu0 0.0
        %1510 = vmatpush1.msra.mxu0 0.0
        %1511 = vmatprep.subr.mxu0 0.0
        %1512 = vmatpush1.msra.mxu0 0.0
        %1513 = vmatprep.subr.mxu0 0.0
        %1514 = vmatpush1.msra.mxu0 0.0
        %1515 = vmatprep.subr.mxu0 0.0
        %1516 = vmatpush1.msra.mxu0 0.0
        %1517 = vmatprep.subr.mxu0 0.0
        %1518 = vmatpush1.msra.mxu0 0.0
        %1519 = vmatprep.subr.mxu0 0.0
        %1520 = vmatpush1.msra.mxu0 0.0
        %1521 = vmatprep.subr.mxu0 0.0
        %1522 = vmatpush1.msra.mxu0 0.0
        %1523 = vmatprep.subr.mxu0 0.0
        %1524 = vmatpush1.msra.mxu0 0.0
        %1525 = vmatprep.subr.mxu0 0.0
        %1526 = vmatpush1.msra.mxu0 0.0
        %1527 = vmatprep.subr.mxu0 0.0
        %1528 = vmatpush1.msra.mxu0 0.0
        %1529 = vmatprep.subr.mxu0 0.0
        %1530 = vmatpush1.msra.mxu0 0.0
        %1531 = vmatprep.subr.mxu0 0.0
        %1532 = vmatpush1.msra.mxu0 %v1499
        %1533 = vmatprep.subr.mxu0 0.0
        %1534 = vmatpush2.msra.mxu0 0.0
        %1535 = vmatprep.subr.mxu0 0.0
        %1536 = vmatpush2.msra.mxu0 0.0
        %1537 = vmatprep.subr.mxu0 0.0
        %1538 = vmatpush2.msra.mxu0 0.0
        %1539 = vmatprep.subr.mxu0 0.0
        %1540 = vmatpush2.msra.mxu0 0.0
        %1541 = vmatprep.subr.mxu0 0.0
        %1542 = vmatpush2.msra.mxu0 0.0
        %1543 = vmatprep.subr.mxu0 0.0
        %1544 = vmatpush2.msra.mxu0 0.0
        %1545 = vmatprep.subr.mxu0 0.0
        %1546 = vmatpush2.msra.mxu0 0.0
        %1547 = vmatprep.subr.mxu0 0.0
        %1548 = vmatpush2.msra.mxu0 0.0
        %1549 = vmatprep.subr.mxu0 0.0
        %1550 = vmatpush2.msra.mxu0 0.0
        %1551 = vmatprep.subr.mxu0 0.0
        %1552 = vmatpush2.msra.mxu0 0.0
        %1553 = vmatprep.subr.mxu0 0.0
        %1554 = vmatpush2.msra.mxu0 0.0
        %1555 = vmatprep.subr.mxu0 0.0
        %1556 = vmatpush2.msra.mxu0 0.0
        %1557 = vmatprep.subr.mxu0 0.0
        %1558 = vmatpush2.msra.mxu0 0.0
        %1559 = vmatprep.subr.mxu0 0.0
        %1560 = vmatpush2.msra.mxu0 0.0
        %1561 = vmatprep.subr.mxu0 0.0
        %1562 = vmatpush2.msra.mxu0 0.0
        %1563 = vmatprep.subr.mxu0 0.0
        %1564 = vmatpush2.msra.mxu0 0.0
        %1565 = vmatprep.mubr.f32.mxu0 0.0
        %1566 = vmatmul.mubr.f32.gmra.mxu0 %v1403
        %v1567 = vpop.f32.mrf.mxu0
        %v1568 = vadd.f32 0.0, %v1567
        %v1569 = vpop.f32.mrf.mxu0
        %1570 = vmatprep.mubr.f32.mxu0 0.0
        %1571 = vmatmul.mubr.f32.gmra.mxu0 %v1406
        %v1572 = vpop.f32.mrf.mxu0
        %v1573 = vadd.f32 0.0, %v1572
        %v1574 = vpop.f32.mrf.mxu0
        %1575 = vmatprep.mubr.f32.mxu0 0.0
        %1576 = vmatmul.mubr.f32.gmra.mxu0 %v1409
        %v1577 = vpop.f32.mrf.mxu0
        %v1578 = vadd.f32 0.0, %v1577
        %v1579 = vpop.f32.mrf.mxu0
        %1580 = vmatprep.mubr.f32.mxu0 0.0
        %1581 = vmatmul.mubr.f32.gmra.mxu0 %v1412
        %v1582 = vpop.f32.mrf.mxu0
        %v1583 = vadd.f32 0.0, %v1582
        %v1584 = vpop.f32.mrf.mxu0
        %1585 = vmatprep.mubr.f32.mxu0 0.0
        %1586 = vmatmul.mubr.f32.gmra.mxu0 %v1415
        %v1587 = vpop.f32.mrf.mxu0
        %v1588 = vadd.f32 0.0, %v1587
        %v1589 = vpop.f32.mrf.mxu0
        %1590 = vmatprep.mubr.f32.mxu0 0.0
        %1591 = vmatmul.mubr.f32.gmra.mxu0 %v1418
        %v1592 = vpop.f32.mrf.mxu0
        %v1593 = vadd.f32 0.0, %v1592
        %v1594 = vpop.f32.mrf.mxu0
        %1595 = vmatprep.mubr.f32.mxu0 0.0
        %1596 = vmatmul.mubr.f32.gmra.mxu0 %v1421
        %v1597 = vpop.f32.mrf.mxu0
        %v1598 = vadd.f32 0.0, %v1597
        %v1599 = vpop.f32.mrf.mxu0
        %1600 = vmatprep.mubr.f32.mxu0 0.0
        %1601 = vmatmul.mubr.f32.gmra.mxu0 %v1424
        %v1602 = vpop.f32.mrf.mxu0
        %v1603 = vadd.f32 0.0, %v1602
        %v1604 = vpop.f32.mrf.mxu0
        %1605 = vmatprep.mubr.f32.mxu0 0.0
        %1606 = vmatmul.mubr.f32.gmra.mxu0 %v1427
        %v1607 = vpop.f32.mrf.mxu0
        %v1608 = vadd.f32 0.0, %v1607
        %v1609 = vpop.f32.mrf.mxu0
        %1610 = vmatprep.mubr.f32.mxu0 0.0
        %1611 = vmatmul.mubr.f32.gmra.mxu0 %v1430
        %v1612 = vpop.f32.mrf.mxu0
        %v1613 = vadd.f32 0.0, %v1612
        %v1614 = vpop.f32.mrf.mxu0
        %1615 = vmatprep.mubr.f32.mxu0 0.0
        %1616 = vmatmul.mubr.f32.gmra.mxu0 %v1433
        %v1617 = vpop.f32.mrf.mxu0
        %v1618 = vadd.f32 0.0, %v1617
        %v1619 = vpop.f32.mrf.mxu0
        %1620 = vmatprep.mubr.f32.mxu0 0.0
        %1621 = vmatmul.mubr.f32.gmra.mxu0 %v1436
        %v1622 = vpop.f32.mrf.mxu0
        %v1623 = vadd.f32 0.0, %v1622
        %v1624 = vpop.f32.mrf.mxu0
        %1625 = vmatprep.mubr.f32.mxu0 0.0
        %1626 = vmatmul.mubr.f32.gmra.mxu0 %v1439
        %v1627 = vpop.f32.mrf.mxu0
        %v1628 = vadd.f32 0.0, %v1627
        %v1629 = vpop.f32.mrf.mxu0
        %1630 = vmatprep.mubr.f32.mxu0 0.0
        %1631 = vmatmul.mubr.f32.gmra.mxu0 %v1442
        %v1632 = vpop.f32.mrf.mxu0
        %v1633 = vadd.f32 0.0, %v1632
        %v1634 = vpop.f32.mrf.mxu0
        %1635 = vmatprep.mubr.f32.mxu0 0.0
        %1636 = vmatmul.mubr.f32.gmra.mxu0 %v1445
        %v1637 = vpop.f32.mrf.mxu0
        %v1638 = vadd.f32 0.0, %v1637
        %v1639 = vpop.f32.mrf.mxu0
        %1640 = vmatprep.mubr.f32.mxu0 0.0
        %1641 = vmatmul.mubr.f32.gmra.mxu0 %v1448
        %v1642 = vpop.f32.mrf.mxu0
        %v1643 = vadd.f32 0.0, %v1642
        %v1644 = vpop.f32.mrf.mxu0
        %1645 = vmatprep.mubr.f32.mxu0 0.0
        %1646 = vmatmul.mubr.f32.gmra.mxu0 %v1451
        %v1647 = vpop.f32.mrf.mxu0
        %v1648 = vadd.f32 0.0, %v1647
        %v1649 = vpop.f32.mrf.mxu0
        %1650 = vmatprep.mubr.f32.mxu0 0.0
        %1651 = vmatmul.mubr.f32.gmra.mxu0 %v1454
        %v1652 = vpop.f32.mrf.mxu0
        %v1653 = vadd.f32 0.0, %v1652
        %v1654 = vpop.f32.mrf.mxu0
        %1655 = vmatprep.mubr.f32.mxu0 0.0
        %1656 = vmatmul.mubr.f32.gmra.mxu0 %v1457
        %v1657 = vpop.f32.mrf.mxu0
        %v1658 = vadd.f32 0.0, %v1657
        %v1659 = vpop.f32.mrf.mxu0
        %1660 = vmatprep.mubr.f32.mxu0 0.0
        %1661 = vmatmul.mubr.f32.gmra.mxu0 %v1460
        %v1662 = vpop.f32.mrf.mxu0
        %v1663 = vadd.f32 0.0, %v1662
        %v1664 = vpop.f32.mrf.mxu0
        %1665 = vmatprep.mubr.f32.mxu0 0.0
        %1666 = vmatmul.mubr.f32.gmra.mxu0 %v1463
        %v1667 = vpop.f32.mrf.mxu0
        %v1668 = vadd.f32 0.0, %v1667
        %v1669 = vpop.f32.mrf.mxu0
        %1670 = vmatprep.mubr.f32.mxu0 0.0
        %1671 = vmatmul.mubr.f32.gmra.mxu0 %v1466
        %v1672 = vpop.f32.mrf.mxu0
        %v1673 = vadd.f32 0.0, %v1672
        %v1674 = vpop.f32.mrf.mxu0
        %1675 = vmatprep.mubr.f32.mxu0 0.0
        %1676 = vmatmul.mubr.f32.gmra.mxu0 %v1469
        %v1677 = vpop.f32.mrf.mxu0
        %v1678 = vadd.f32 0.0, %v1677
        %v1679 = vpop.f32.mrf.mxu0
        %1680 = vmatprep.mubr.f32.mxu0 0.0
        %1681 = vmatmul.mubr.f32.gmra.mxu0 %v1472
        %v1682 = vpop.f32.mrf.mxu0
        %v1683 = vadd.f32 0.0, %v1682
        %v1684 = vpop.f32.mrf.mxu0
        %1685 = vmatprep.mubr.f32.mxu0 0.0
        %1686 = vmatmul.mubr.f32.gmra.mxu0 %v1475
        %v1687 = vpop.f32.mrf.mxu0
        %v1688 = vadd.f32 0.0, %v1687
        %v1689 = vpop.f32.mrf.mxu0
        %1690 = vmatprep.mubr.f32.mxu0 0.0
        %1691 = vmatmul.mubr.f32.gmra.mxu0 %v1478
        %v1692 = vpop.f32.mrf.mxu0
        %v1693 = vadd.f32 0.0, %v1692
        %v1694 = vpop.f32.mrf.mxu0
        %1695 = vmatprep.mubr.f32.mxu0 0.0
        %1696 = vmatmul.mubr.f32.gmra.mxu0 %v1481
        %v1697 = vpop.f32.mrf.mxu0
        %v1698 = vadd.f32 0.0, %v1697
        %v1699 = vpop.f32.mrf.mxu0
        %1700 = vmatprep.mubr.f32.mxu0 0.0
        %1701 = vmatmul.mubr.f32.gmra.mxu0 %v1484
        %v1702 = vpop.f32.mrf.mxu0
        %v1703 = vadd.f32 0.0, %v1702
        %v1704 = vpop.f32.mrf.mxu0
        %1705 = vmatprep.mubr.f32.mxu0 0.0
        %1706 = vmatmul.mubr.f32.gmra.mxu0 %v1487
        %v1707 = vpop.f32.mrf.mxu0
        %v1708 = vadd.f32 0.0, %v1707
        %v1709 = vpop.f32.mrf.mxu0
        %1710 = vmatprep.mubr.f32.mxu0 0.0
        %1711 = vmatmul.mubr.f32.gmra.mxu0 %v1490
        %v1712 = vpop.f32.mrf.mxu0
        %v1713 = vadd.f32 0.0, %v1712
        %v1714 = vpop.f32.mrf.mxu0
        %1715 = vmatprep.mubr.f32.mxu0 0.0
        %1716 = vmatmul.mubr.f32.gmra.mxu0 %v1493
        %v1717 = vpop.f32.mrf.mxu0
        %v1718 = vadd.f32 0.0, %v1717
        %v1719 = vpop.f32.mrf.mxu0
        %1720 = vmatprep.mubr.f32.mxu0 0.0
        %1721 = vmatmul.mubr.f32.gmra.mxu0 %v1496
        %v1722 = vpop.f32.mrf.mxu0
        %v1723 = vadd.f32 0.0, %v1722
        %v1724 = vpop.f32.mrf.mxu0
        %1725 = vdwg.mxu0
        %v1726 = vadd.f32 %v1336, %v1568
        %v1727 = vadd.f32 %v1337, %v1573
        %v1728 = vadd.f32 %v1338, %v1578
        %v1729 = vadd.f32 %v1339, %v1583
        %v1730 = vadd.f32 %v1340, %v1588
        %v1731 = vadd.f32 %v1341, %v1593
        %v1732 = vadd.f32 %v1342, %v1598
        %v1733 = vadd.f32 %v1343, %v1603
        %v1734 = vadd.f32 %v1344, %v1608
        %v1735 = vadd.f32 %v1345, %v1613
        %v1736 = vadd.f32 %v1346, %v1618
        %v1737 = vadd.f32 %v1347, %v1623
        %v1738 = vadd.f32 %v1348, %v1628
        %v1739 = vadd.f32 %v1349, %v1633
        %v1740 = vadd.f32 %v1350, %v1638
        %v1741 = vadd.f32 %v1351, %v1643
        %v1742 = vadd.f32 %v1352, %v1648
        %v1743 = vadd.f32 %v1353, %v1653
        %v1744 = vadd.f32 %v1354, %v1658
        %v1745 = vadd.f32 %v1355, %v1663
        %v1746 = vadd.f32 %v1356, %v1668
        %v1747 = vadd.f32 %v1357, %v1673
        %v1748 = vadd.f32 %v1358, %v1678
        %v1749 = vadd.f32 %v1359, %v1683
        %v1750 = vadd.f32 %v1360, %v1688
        %v1751 = vadd.f32 %v1361, %v1693
        %v1752 = vadd.f32 %v1362, %v1698
        %v1753 = vadd.f32 %v1363, %v1703
        %v1754 = vadd.f32 %v1364, %v1708
        %v1755 = vadd.f32 %v1365, %v1713
        %v1756 = vadd.f32 %v1366, %v1718
        %v1757 = vadd.f32 %v1367, %v1723
        %1758 = vst [vmem:[%s177] sm:$0xff] %v1726
        %1759 = vst [vmem:[%s177 + $0x8] sm:$0xff] %v1727
        %1760 = vst [vmem:[%s177 + $0x10] sm:$0xff] %v1728
        %1761 = vst [vmem:[%s177 + $0x18] sm:$0xff] %v1729
        %1762 = vst [vmem:[%s177 + $0x20] sm:$0xff] %v1730
        %1763 = vst [vmem:[%s177 + $0x28] sm:$0xff] %v1731
        %1764 = vst [vmem:[%s177 + $0x30] sm:$0xff] %v1732
        %1765 = vst [vmem:[%s177 + $0x38] sm:$0xff] %v1733
        %1766 = vst [vmem:[%s177 + $0x40] sm:$0xff] %v1734
        %1767 = vst [vmem:[%s177 + $0x48] sm:$0xff] %v1735
        %1768 = vst [vmem:[%s177 + $0x50] sm:$0xff] %v1736
        %1769 = vst [vmem:[%s177 + $0x58] sm:$0xff] %v1737
        %1770 = vst [vmem:[%s177 + $0x60] sm:$0xff] %v1738
        %1771 = vst [vmem:[%s177 + $0x68] sm:$0xff] %v1739
        %1772 = vst [vmem:[%s177 + $0x70] sm:$0xff] %v1740
        %1773 = vst [vmem:[%s177 + $0x78] sm:$0xff] %v1741
        %1774 = vst [vmem:[%s177 + $0x80] sm:$0xff] %v1742
        %1775 = vst [vmem:[%s177 + $0x88] sm:$0xff] %v1743
        %1776 = vst [vmem:[%s177 + $0x90] sm:$0xff] %v1744
        %1777 = vst [vmem:[%s177 + $0x98] sm:$0xff] %v1745
        %1778 = vst [vmem:[%s177 + $0xa0] sm:$0xff] %v1746
        %1779 = vst [vmem:[%s177 + $0xa8] sm:$0xff] %v1747
        %1780 = vst [vmem:[%s177 + $0xb0] sm:$0xff] %v1748
        %1781 = vst [vmem:[%s177 + $0xb8] sm:$0xff] %v1749
        %1782 = vst [vmem:[%s177 + $0xc0] sm:$0xff] %v1750
        %1783 = vst [vmem:[%s177 + $0xc8] sm:$0xff] %v1751
        %1784 = vst [vmem:[%s177 + $0xd0] sm:$0xff] %v1752
        %1785 = vst [vmem:[%s177 + $0xd8] sm:$0xff] %v1753
        %1786 = vst [vmem:[%s177 + $0xe0] sm:$0xff] %v1754
        %1787 = vst [vmem:[%s177 + $0xe8] sm:$0xff] %v1755
        %1788 = vst [vmem:[%s177 + $0xf0] sm:$0xff] %v1756
        %1789 = vst [vmem:[%s177 + $0xf8] sm:$0xff] %v1757
        %s1790 = sand.u32 %s107, 1
        %s1791 = scalar_lea.sflag [#allocation3], %s1790
        %s1792 = sand.u32 %s107, 1
        %s1793 = smul.addr %s1792, 256
        %s1794 = scalar_lea.vmem [#allocation2], %s1793
        // Predicated region
        $region33: #{tpu_custom_call.1} parent=31 // pred_check
          %p1795 = pneg %p117
        $region34: #{tpu_custom_call.1} parent=31 // pred_check_branch
          %1797 = sbr.rel (%p1795) target = $region36
        $region35: #{tpu_custom_call.1} parent=31 // pred_region
          %s1798 = smul.u32 16, %s22
          %s1800 = ssub.s32 4096, 4096
          %1801 = vsyncadd %s1791, %s1800
          %s1802 = smul.addr %s1798, 2
          %s1803 = smul.addr %s21, 32
          %s1804 = sadd.s32 %s1802, %s1803
          %s1805 = smul.addr %s1804, 128
          %s1806 = scalar_lea.hbm %s3, %s1805
          %s1807 = sshll.u32 %s1794, 4
          %s1808 = int_to_ptr.vmem [resolvable:$true] %s1807
          %1813 = dma.vmem_to_hbm [thread:$0]  %s1808, 4096, %s1806, %s1791, 128, 128, 8
        $region36: #{tpu_custom_call.1} parent=31 // pred_fallthru
          _
      $region32: #{tpu_custom_call.1} parent=5 // pred_fallthru
        _
      %p1814 = scmp.le.s32.totalorder 2, %s12
      // Predicated region
      $region37: #{tpu_custom_call.1} parent=5 // pred_check
        %p1815 = pneg %p1814
      $region38: #{tpu_custom_call.1} parent=5 // pred_check_branch
        %1817 = sbr.rel (%p1815) target = $region40
      $region39: #{tpu_custom_call.1} parent=5 // pred_region
        %s1818 = ssub.s32 %s12, 2
        // Predicated region
        $region41: #{tpu_custom_call.1} parent=39 // pred_check
          %p1819 = pneg %p123
        $region42: #{tpu_custom_call.1} parent=39 // pred_check_branch
          %1821 = sbr.rel (%p1819) target = $region44
        $region43: #{tpu_custom_call.1} parent=39 // pred_region
          %s1822 = sand.u32 %s108, 1
          %s1823 = scalar_lea.sflag [#allocation3], %s1822
          %s1824 = sand.u32 %s108, 1
          %s1825 = smul.addr %s1824, 256
          %s1826 = scalar_lea.vmem [#allocation2], %s1825
          %1827 = dma.done %s1823, 4096
        $region44: #{tpu_custom_call.1} parent=39 // pred_fallthru
          _
      $region40: #{tpu_custom_call.1} parent=5 // pred_fallthru
        _
    $region6: #{tpu_custom_call.1} parent=1 // loop_footer
      %s16 = sadd.s32 1, %s12
    $region7: #{tpu_custom_call.1} parent=1 // loop_footer_branch
      %11 = sbr.rel target = $region3
    $region8: #{tpu_custom_call.1} parent=1 // loop_exit
      _
    %1828 = vsyncpa [#allocation3], 1
    %s1829 = scalar_lea.sflag [#allocation3], 1
    %1830 = vsyncpa %s1829, 1

</llo_original>
